<compile_context>
chip_gen: v5e
topology: v5e:2x2
jax: 0.10.0
libtpu: 0.0.40
codegen_flags: <defaults>
</compile_context>

<pallas_src>
import functools

import jax
import jax.numpy as jnp
import numpy as np
from jax.experimental import pallas as pl
from jax.experimental.pallas import tpu as pltpu


def _lstm_kernel(x_ref, wih0_ref, wihr_ref, whh_ref, b_ref, wout_ref, bout_ref,
                 out_ref):
    """Full stacked LSTM + Linear head in a single kernel invocation.

    x_ref    : (T, 1)              scalar input sequence (column vector)
    wih0_ref : (1, 4H)             layer-0 input->gates weight row (input_size==1)
    wihr_ref : (max(L-1,1), H, 4H) input->gates weights, layers 1..L-1 (pre-T)
    whh_ref  : (L, H, 4H)          hidden->gates weights (pre-transposed)
    b_ref    : (L, 4H)             b_ih + b_hh
    wout_ref : (H, O)              output Linear weight (pre-transposed)
    bout_ref : (1, O)              output Linear bias
    out_ref  : (1, O)              prediction
    """
    T = x_ref.shape[0]
    L, H, _ = whh_ref.shape

    h_last = None
    seq = None                      # (T, H) f32 value: previous layer's outputs

    for l in range(L):              # L is small & static -> unrolled
        bias = b_ref[pl.ds(l, 1), :]                        # (1, 4H)

        # Gate pre-activations for all T steps at once (off the serial chain).
        if l == 0:
            # input_size == 1: the input projection is an outer product -> VPU,
            # no MXU op and no zero-padded (H,4H) layer-0 weight needed.
            preact = x_ref[...] * wih0_ref[...] + bias      # (T, 4H)
        else:
            preact = jnp.dot(seq.astype(jnp.bfloat16),
                             wihr_ref[l - 1].astype(jnp.bfloat16),
                             preferred_element_type=jnp.float32) + bias

        whh_l = whh_ref[l].astype(jnp.bfloat16)             # cast once per layer

        h = jnp.zeros((1, H), jnp.float32)
        c = jnp.zeros((1, H), jnp.float32)
        hs = []
        for t in range(T):          # T is small & static -> unrolled
            # Only one (1,H)@(H,4H) matmul sits on the recurrent chain.
            gates = (preact[t:t + 1, :]
                     + jnp.dot(h.astype(jnp.bfloat16), whh_l,
                               preferred_element_type=jnp.float32))  # (1, 4H)
            sig = jax.nn.sigmoid(gates)   # one EUP pass over the full gate vreg
            tnh = jnp.tanh(gates)         # one EUP pass over the full gate vreg
            i_g = sig[:, 0 * H:1 * H]
            f_g = sig[:, 1 * H:2 * H]
            g_g = tnh[:, 2 * H:3 * H]
            o_g = sig[:, 3 * H:4 * H]
            c = f_g * c + i_g * g_g
            h = o_g * jnp.tanh(c)
            hs.append(h)

        if l + 1 < L:
            # Next layer's input sequence, kept entirely in vregs (one (T,H)
            # value assembled once -- no per-step masked VMEM stores).
            seq = jnp.concatenate(hs, axis=0)               # (T, H)
        h_last = h

    # lstmOut[-1, 0, :] == h_last of the final layer; apply the Linear head.
    out_ref[...] = (jnp.dot(h_last, wout_ref[...],
                            preferred_element_type=jnp.float32)
                    + bout_ref[...])


@functools.partial(jax.jit, static_argnames=("hidden", "out_size", "layers"))
def simple_rnn_forward(x, params, *, hidden, out_size, layers):
    """x: 1-D array of T scalars (the PyTorch `input.view(-1, 1, 1)` sequence)."""
    del hidden, layers  # shapes are carried by the parameter arrays
    T = x.shape[0]
    x_col = x.astype(jnp.float32).reshape(T, 1)
    wih0, wih_rest, whh, b, wout_t, bout = params

    vmem = pl.BlockSpec(memory_space=pltpu.MemorySpace.VMEM)
    out = pl.pallas_call(
        _lstm_kernel,
        out_shape=jax.ShapeDtypeStruct((1, out_size), jnp.float32),
        in_specs=[vmem] * 7,
        out_specs=vmem,
    )(x_col, wih0, wih_rest, whh, b, wout_t, bout)
    return out[0]  # (outputSize,), matching PyTorch's predictedOut


def init_params(key, input_size, hidden, out_size, layers):
    """Deterministic parameter init mirroring PyTorch's LSTM/Linear shapes."""
    assert input_size == 1, "forward does input.view(-1, 1, 1) -> input_size == 1"
    H, O, L = hidden, out_size, layers
    bound = 1.0 / np.sqrt(H)
    keys = jax.random.split(key, 4 * L + 2)
    k = iter(keys)

    wih0_row = None                                        # (1, 4H)
    wih_rest = np.zeros((max(L - 1, 1), H, 4 * H), np.float32)
    whh_t = np.zeros((L, H, 4 * H), np.float32)
    b = np.zeros((L, 4 * H), np.float32)

    for l in range(L):
        in_dim = input_size if l == 0 else H
        w_ih = jax.random.uniform(next(k), (4 * H, in_dim), jnp.float32, -bound, bound)
        w_hh = jax.random.uniform(next(k), (4 * H, H), jnp.float32, -bound, bound)
        b_ih = jax.random.uniform(next(k), (4 * H,), jnp.float32, -bound, bound)
        b_hh = jax.random.uniform(next(k), (4 * H,), jnp.float32, -bound, bound)
        if l == 0:
            wih0_row = np.asarray(w_ih).T.reshape(1, 4 * H)
        else:
            wih_rest[l - 1] = np.asarray(w_ih).T           # (H, 4H)
        whh_t[l] = np.asarray(w_hh).T
        b[l] = np.asarray(b_ih) + np.asarray(b_hh)

    w_out = jax.random.uniform(next(k), (O, H), jnp.float32, -bound, bound)
    b_out = jax.random.uniform(next(k), (O,), jnp.float32, -bound, bound)

    return (jnp.asarray(wih0_row, jnp.float32),
            jnp.asarray(wih_rest, jnp.float32),
            jnp.asarray(whh_t, jnp.float32),
            jnp.asarray(b, jnp.float32),
            jnp.asarray(w_out).T.astype(jnp.float32),
            jnp.asarray(b_out, jnp.float32).reshape(1, O))


def reference_forward(x, params, hidden, out_size, layers):
    """Pure-JAX f32 reference of the PyTorch forward, for correctness checking."""
    wih0, wih_rest, whh, b, wout_t, bout = params
    H = hidden
    T = x.shape[0]
    x = x.astype(jnp.float32)
    seq = None
    h_last = None
    for l in range(layers):
        h = jnp.zeros((H,), jnp.float32)
        c = jnp.zeros((H,), jnp.float32)
        outs = []
        for t in range(T):
            ih = x[t] * wih0[0] if l == 0 else seq[t] @ wih_rest[l - 1]
            gates = ih + h @ whh[l] + b[l]
            i_g = jax.nn.sigmoid(gates[0 * H:1 * H])
            f_g = jax.nn.sigmoid(gates[1 * H:2 * H])
            g_g = jnp.tanh(gates[2 * H:3 * H])
            o_g = jax.nn.sigmoid(gates[3 * H:4 * H])
            c = f_g * c + i_g * g_g
            h = o_g * jnp.tanh(c)
            outs.append(h)
        seq = jnp.stack(outs)
        h_last = h
    return h_last @ wout_t + bout[0]


if __name__ == "__main__":
    # Module hyperparameters (small, consistent with the forward pass):
    INPUT_SIZE = 1      # forward does input.view(-1, 1, 1) -> input_size = 1
    HIDDEN = 32         # lstmLayerSize
    OUT_SIZE = 4        # outputSize
    LAYERS = 2          # noLSTMLayers
    SEQ_LEN = 8         # T after .view(-1, 1, 1)

    key = jax.random.PRNGKey(0)
    k_param, k_x = jax.random.split(key)
    params = init_params(k_param, INPUT_SIZE, HIDDEN, OUT_SIZE, LAYERS)
    x = jax.random.normal(k_x, (SEQ_LEN,), jnp.float32)

    out = simple_rnn_forward(x, params, hidden=HIDDEN, out_size=OUT_SIZE,
                             layers=LAYERS)
    out = jax.block_until_ready(out)

    ref = reference_forward(x, params, HIDDEN, OUT_SIZE, LAYERS)
    # Tolerance covers the in-kernel bf16 matmul operands (state/gate math and
    # the reference stay in f32); observed drift is ~1e-3..1e-2 at L=2, T=8.
    np.testing.assert_allclose(np.asarray(out), np.asarray(ref),
                               rtol=2e-2, atol=2e-2)

    print("KERNEL_OK")
</pallas_src>

<mosaic_0001>
module attributes {stable_mosaic.version = 11 : i64} {
  func.func @_lstm_kernel(%arg0: memref<8x1xf32, #tpu.memory_space<vmem>>, %arg1: memref<1x128xf32, #tpu.memory_space<vmem>>, %arg2: memref<1x32x128xf32, #tpu.memory_space<vmem>>, %arg3: memref<2x32x128xf32, #tpu.memory_space<vmem>>, %arg4: memref<2x128xf32, #tpu.memory_space<vmem>>, %arg5: memref<32x4xf32, #tpu.memory_space<vmem>>, %arg6: memref<1x4xf32, #tpu.memory_space<vmem>>, %arg7: memref<1x4xf32, #tpu.memory_space<vmem>>) attributes {dimension_semantics = [], scalar_prefetch = 0 : i64, scratch_operands = 0 : i64, tpu.core_type = #tpu.core_type<tc>} {
    %c0 = arith.constant 0 : index
    %c0_0 = arith.constant 0 : index
    %0 = vector.load %arg4[%c0, %c0_0] : memref<2x128xf32, #tpu.memory_space<vmem>>, vector<1x128xf32>
    %c0_1 = arith.constant 0 : index
    %c0_2 = arith.constant 0 : index
    %1 = vector.load %arg0[%c0_1, %c0_2] : memref<8x1xf32, #tpu.memory_space<vmem>>, vector<8x1xf32>
    %c0_3 = arith.constant 0 : index
    %c0_4 = arith.constant 0 : index
    %2 = vector.load %arg1[%c0_3, %c0_4] : memref<1x128xf32, #tpu.memory_space<vmem>>, vector<1x128xf32>
    %3 = vector.broadcast %1 : vector<8x1xf32> to vector<8x128xf32>
    %4 = vector.broadcast %2 : vector<1x128xf32> to vector<8x128xf32>
    %5 = arith.mulf %3, %4 : vector<8x128xf32>
    %6 = vector.broadcast %0 : vector<1x128xf32> to vector<8x128xf32>
    %7 = arith.addf %5, %6 : vector<8x128xf32>
    %c0_5 = arith.constant 0 : index
    %c0_6 = arith.constant 0 : index
    %c0_7 = arith.constant 0 : index
    %8 = vector.load %arg3[%c0_5, %c0_6, %c0_7] : memref<2x32x128xf32, #tpu.memory_space<vmem>>, vector<1x32x128xf32>
    %9 = vector.shape_cast %8 : vector<1x32x128xf32> to vector<32x128xf32>
    %10 = arith.truncf %9 : vector<32x128xf32> to vector<32x128xbf16>
    %cst = arith.constant 0.000000e+00 : f32
    %11 = vector.broadcast %cst : f32 to vector<1x32xf32>
    %cst_8 = arith.constant 0.000000e+00 : f32
    %12 = vector.broadcast %cst_8 : f32 to vector<1x32xf32>
    %13 = vector.extract_strided_slice %7 {offsets = [0, 0], sizes = [1, 128], strides = [1, 1]} : vector<8x128xf32> to vector<1x128xf32>
    %14 = arith.truncf %11 : vector<1x32xf32> to vector<1x32xbf16>
    %cst_9 = arith.constant dense<0.000000e+00> : vector<1x128xf32>
    %15 = tpu.matmul %14, %10, %cst_9 {dimension_numbers = #tpu.dot_dimension_numbers<[1], [0], [0], [1], [0, 0, 1, 1], [], []>} : vector<1x32xbf16>, vector<32x128xbf16>, vector<1x128xf32> -> vector<1x128xf32>
    %16 = arith.addf %13, %15 : vector<1x128xf32>
    %17 = arith.negf %16 : vector<1x128xf32>
    %18 = math.exp %17 : vector<1x128xf32>
    %cst_10 = arith.constant 1.000000e+00 : f32
    %19 = vector.broadcast %cst_10 : f32 to vector<1x128xf32>
    %20 = arith.addf %19, %18 : vector<1x128xf32>
    %21 = arith.divf %19, %20 : vector<1x128xf32>
    %22 = math.tanh %16 : vector<1x128xf32>
    %23 = vector.extract_strided_slice %21 {offsets = [0, 0], sizes = [1, 32], strides = [1, 1]} : vector<1x128xf32> to vector<1x32xf32>
    %24 = vector.extract_strided_slice %21 {offsets = [0, 32], sizes = [1, 32], strides = [1, 1]} : vector<1x128xf32> to vector<1x32xf32>
    %25 = vector.extract_strided_slice %22 {offsets = [0, 64], sizes = [1, 32], strides = [1, 1]} : vector<1x128xf32> to vector<1x32xf32>
    %26 = vector.extract_strided_slice %21 {offsets = [0, 96], sizes = [1, 32], strides = [1, 1]} : vector<1x128xf32> to vector<1x32xf32>
    %27 = arith.mulf %24, %12 : vector<1x32xf32>
    %28 = arith.mulf %23, %25 : vector<1x32xf32>
    %29 = arith.addf %27, %28 : vector<1x32xf32>
    %30 = math.tanh %29 : vector<1x32xf32>
    %31 = arith.mulf %26, %30 : vector<1x32xf32>
    %32 = vector.extract_strided_slice %7 {offsets = [1, 0], sizes = [1, 128], strides = [1, 1]} : vector<8x128xf32> to vector<1x128xf32>
    %33 = arith.truncf %31 : vector<1x32xf32> to vector<1x32xbf16>
    %cst_11 = arith.constant dense<0.000000e+00> : vector<1x128xf32>
    %34 = tpu.matmul %33, %10, %cst_11 {dimension_numbers = #tpu.dot_dimension_numbers<[1], [0], [0], [1], [0, 0, 1, 1], [], []>} : vector<1x32xbf16>, vector<32x128xbf16>, vector<1x128xf32> -> vector<1x128xf32>
    %35 = arith.addf %32, %34 : vector<1x128xf32>
    %36 = arith.negf %35 : vector<1x128xf32>
    %37 = math.exp %36 : vector<1x128xf32>
    %cst_12 = arith.constant 1.000000e+00 : f32
    %38 = vector.broadcast %cst_12 : f32 to vector<1x128xf32>
    %39 = arith.addf %38, %37 : vector<1x128xf32>
    %40 = arith.divf %38, %39 : vector<1x128xf32>
    %41 = math.tanh %35 : vector<1x128xf32>
    %42 = vector.extract_strided_slice %40 {offsets = [0, 0], sizes = [1, 32], strides = [1, 1]} : vector<1x128xf32> to vector<1x32xf32>
    %43 = vector.extract_strided_slice %40 {offsets = [0, 32], sizes = [1, 32], strides = [1, 1]} : vector<1x128xf32> to vector<1x32xf32>
    %44 = vector.extract_strided_slice %41 {offsets = [0, 64], sizes = [1, 32], strides = [1, 1]} : vector<1x128xf32> to vector<1x32xf32>
    %45 = vector.extract_strided_slice %40 {offsets = [0, 96], sizes = [1, 32], strides = [1, 1]} : vector<1x128xf32> to vector<1x32xf32>
    %46 = arith.mulf %43, %29 : vector<1x32xf32>
    %47 = arith.mulf %42, %44 : vector<1x32xf32>
    %48 = arith.addf %46, %47 : vector<1x32xf32>
    %49 = math.tanh %48 : vector<1x32xf32>
    %50 = arith.mulf %45, %49 : vector<1x32xf32>
    %51 = vector.extract_strided_slice %7 {offsets = [2, 0], sizes = [1, 128], strides = [1, 1]} : vector<8x128xf32> to vector<1x128xf32>
    %52 = arith.truncf %50 : vector<1x32xf32> to vector<1x32xbf16>
    %cst_13 = arith.constant dense<0.000000e+00> : vector<1x128xf32>
    %53 = tpu.matmul %52, %10, %cst_13 {dimension_numbers = #tpu.dot_dimension_numbers<[1], [0], [0], [1], [0, 0, 1, 1], [], []>} : vector<1x32xbf16>, vector<32x128xbf16>, vector<1x128xf32> -> vector<1x128xf32>
    %54 = arith.addf %51, %53 : vector<1x128xf32>
    %55 = arith.negf %54 : vector<1x128xf32>
    %56 = math.exp %55 : vector<1x128xf32>
    %cst_14 = arith.constant 1.000000e+00 : f32
    %57 = vector.broadcast %cst_14 : f32 to vector<1x128xf32>
    %58 = arith.addf %57, %56 : vector<1x128xf32>
    %59 = arith.divf %57, %58 : vector<1x128xf32>
    %60 = math.tanh %54 : vector<1x128xf32>
    %61 = vector.extract_strided_slice %59 {offsets = [0, 0], sizes = [1, 32], strides = [1, 1]} : vector<1x128xf32> to vector<1x32xf32>
    %62 = vector.extract_strided_slice %59 {offsets = [0, 32], sizes = [1, 32], strides = [1, 1]} : vector<1x128xf32> to vector<1x32xf32>
    %63 = vector.extract_strided_slice %60 {offsets = [0, 64], sizes = [1, 32], strides = [1, 1]} : vector<1x128xf32> to vector<1x32xf32>
    %64 = vector.extract_strided_slice %59 {offsets = [0, 96], sizes = [1, 32], strides = [1, 1]} : vector<1x128xf32> to vector<1x32xf32>
    %65 = arith.mulf %62, %48 : vector<1x32xf32>
    %66 = arith.mulf %61, %63 : vector<1x32xf32>
    %67 = arith.addf %65, %66 : vector<1x32xf32>
    %68 = math.tanh %67 : vector<1x32xf32>
    %69 = arith.mulf %64, %68 : vector<1x32xf32>
    %70 = vector.extract_strided_slice %7 {offsets = [3, 0], sizes = [1, 128], strides = [1, 1]} : vector<8x128xf32> to vector<1x128xf32>
    %71 = arith.truncf %69 : vector<1x32xf32> to vector<1x32xbf16>
    %cst_15 = arith.constant dense<0.000000e+00> : vector<1x128xf32>
    %72 = tpu.matmul %71, %10, %cst_15 {dimension_numbers = #tpu.dot_dimension_numbers<[1], [0], [0], [1], [0, 0, 1, 1], [], []>} : vector<1x32xbf16>, vector<32x128xbf16>, vector<1x128xf32> -> vector<1x128xf32>
    %73 = arith.addf %70, %72 : vector<1x128xf32>
    %74 = arith.negf %73 : vector<1x128xf32>
    %75 = math.exp %74 : vector<1x128xf32>
    %cst_16 = arith.constant 1.000000e+00 : f32
    %76 = vector.broadcast %cst_16 : f32 to vector<1x128xf32>
    %77 = arith.addf %76, %75 : vector<1x128xf32>
    %78 = arith.divf %76, %77 : vector<1x128xf32>
    %79 = math.tanh %73 : vector<1x128xf32>
    %80 = vector.extract_strided_slice %78 {offsets = [0, 0], sizes = [1, 32], strides = [1, 1]} : vector<1x128xf32> to vector<1x32xf32>
    %81 = vector.extract_strided_slice %78 {offsets = [0, 32], sizes = [1, 32], strides = [1, 1]} : vector<1x128xf32> to vector<1x32xf32>
    %82 = vector.extract_strided_slice %79 {offsets = [0, 64], sizes = [1, 32], strides = [1, 1]} : vector<1x128xf32> to vector<1x32xf32>
    %83 = vector.extract_strided_slice %78 {offsets = [0, 96], sizes = [1, 32], strides = [1, 1]} : vector<1x128xf32> to vector<1x32xf32>
    %84 = arith.mulf %81, %67 : vector<1x32xf32>
    %85 = arith.mulf %80, %82 : vector<1x32xf32>
    %86 = arith.addf %84, %85 : vector<1x32xf32>
    %87 = math.tanh %86 : vector<1x32xf32>
    %88 = arith.mulf %83, %87 : vector<1x32xf32>
    %89 = vector.extract_strided_slice %7 {offsets = [4, 0], sizes = [1, 128], strides = [1, 1]} : vector<8x128xf32> to vector<1x128xf32>
    %90 = arith.truncf %88 : vector<1x32xf32> to vector<1x32xbf16>
    %cst_17 = arith.constant dense<0.000000e+00> : vector<1x128xf32>
    %91 = tpu.matmul %90, %10, %cst_17 {dimension_numbers = #tpu.dot_dimension_numbers<[1], [0], [0], [1], [0, 0, 1, 1], [], []>} : vector<1x32xbf16>, vector<32x128xbf16>, vector<1x128xf32> -> vector<1x128xf32>
    %92 = arith.addf %89, %91 : vector<1x128xf32>
    %93 = arith.negf %92 : vector<1x128xf32>
    %94 = math.exp %93 : vector<1x128xf32>
    %cst_18 = arith.constant 1.000000e+00 : f32
    %95 = vector.broadcast %cst_18 : f32 to vector<1x128xf32>
    %96 = arith.addf %95, %94 : vector<1x128xf32>
    %97 = arith.divf %95, %96 : vector<1x128xf32>
    %98 = math.tanh %92 : vector<1x128xf32>
    %99 = vector.extract_strided_slice %97 {offsets = [0, 0], sizes = [1, 32], strides = [1, 1]} : vector<1x128xf32> to vector<1x32xf32>
    %100 = vector.extract_strided_slice %97 {offsets = [0, 32], sizes = [1, 32], strides = [1, 1]} : vector<1x128xf32> to vector<1x32xf32>
    %101 = vector.extract_strided_slice %98 {offsets = [0, 64], sizes = [1, 32], strides = [1, 1]} : vector<1x128xf32> to vector<1x32xf32>
    %102 = vector.extract_strided_slice %97 {offsets = [0, 96], sizes = [1, 32], strides = [1, 1]} : vector<1x128xf32> to vector<1x32xf32>
    %103 = arith.mulf %100, %86 : vector<1x32xf32>
    %104 = arith.mulf %99, %101 : vector<1x32xf32>
    %105 = arith.addf %103, %104 : vector<1x32xf32>
    %106 = math.tanh %105 : vector<1x32xf32>
    %107 = arith.mulf %102, %106 : vector<1x32xf32>
    %108 = vector.extract_strided_slice %7 {offsets = [5, 0], sizes = [1, 128], strides = [1, 1]} : vector<8x128xf32> to vector<1x128xf32>
    %109 = arith.truncf %107 : vector<1x32xf32> to vector<1x32xbf16>
    %cst_19 = arith.constant dense<0.000000e+00> : vector<1x128xf32>
    %110 = tpu.matmul %109, %10, %cst_19 {dimension_numbers = #tpu.dot_dimension_numbers<[1], [0], [0], [1], [0, 0, 1, 1], [], []>} : vector<1x32xbf16>, vector<32x128xbf16>, vector<1x128xf32> -> vector<1x128xf32>
    %111 = arith.addf %108, %110 : vector<1x128xf32>
    %112 = arith.negf %111 : vector<1x128xf32>
    %113 = math.exp %112 : vector<1x128xf32>
    %cst_20 = arith.constant 1.000000e+00 : f32
    %114 = vector.broadcast %cst_20 : f32 to vector<1x128xf32>
    %115 = arith.addf %114, %113 : vector<1x128xf32>
    %116 = arith.divf %114, %115 : vector<1x128xf32>
    %117 = math.tanh %111 : vector<1x128xf32>
    %118 = vector.extract_strided_slice %116 {offsets = [0, 0], sizes = [1, 32], strides = [1, 1]} : vector<1x128xf32> to vector<1x32xf32>
    %119 = vector.extract_strided_slice %116 {offsets = [0, 32], sizes = [1, 32], strides = [1, 1]} : vector<1x128xf32> to vector<1x32xf32>
    %120 = vector.extract_strided_slice %117 {offsets = [0, 64], sizes = [1, 32], strides = [1, 1]} : vector<1x128xf32> to vector<1x32xf32>
    %121 = vector.extract_strided_slice %116 {offsets = [0, 96], sizes = [1, 32], strides = [1, 1]} : vector<1x128xf32> to vector<1x32xf32>
    %122 = arith.mulf %119, %105 : vector<1x32xf32>
    %123 = arith.mulf %118, %120 : vector<1x32xf32>
    %124 = arith.addf %122, %123 : vector<1x32xf32>
    %125 = math.tanh %124 : vector<1x32xf32>
    %126 = arith.mulf %121, %125 : vector<1x32xf32>
    %127 = vector.extract_strided_slice %7 {offsets = [6, 0], sizes = [1, 128], strides = [1, 1]} : vector<8x128xf32> to vector<1x128xf32>
    %128 = arith.truncf %126 : vector<1x32xf32> to vector<1x32xbf16>
    %cst_21 = arith.constant dense<0.000000e+00> : vector<1x128xf32>
    %129 = tpu.matmul %128, %10, %cst_21 {dimension_numbers = #tpu.dot_dimension_numbers<[1], [0], [0], [1], [0, 0, 1, 1], [], []>} : vector<1x32xbf16>, vector<32x128xbf16>, vector<1x128xf32> -> vector<1x128xf32>
    %130 = arith.addf %127, %129 : vector<1x128xf32>
    %131 = arith.negf %130 : vector<1x128xf32>
    %132 = math.exp %131 : vector<1x128xf32>
    %cst_22 = arith.constant 1.000000e+00 : f32
    %133 = vector.broadcast %cst_22 : f32 to vector<1x128xf32>
    %134 = arith.addf %133, %132 : vector<1x128xf32>
    %135 = arith.divf %133, %134 : vector<1x128xf32>
    %136 = math.tanh %130 : vector<1x128xf32>
    %137 = vector.extract_strided_slice %135 {offsets = [0, 0], sizes = [1, 32], strides = [1, 1]} : vector<1x128xf32> to vector<1x32xf32>
    %138 = vector.extract_strided_slice %135 {offsets = [0, 32], sizes = [1, 32], strides = [1, 1]} : vector<1x128xf32> to vector<1x32xf32>
    %139 = vector.extract_strided_slice %136 {offsets = [0, 64], sizes = [1, 32], strides = [1, 1]} : vector<1x128xf32> to vector<1x32xf32>
    %140 = vector.extract_strided_slice %135 {offsets = [0, 96], sizes = [1, 32], strides = [1, 1]} : vector<1x128xf32> to vector<1x32xf32>
    %141 = arith.mulf %138, %124 : vector<1x32xf32>
    %142 = arith.mulf %137, %139 : vector<1x32xf32>
    %143 = arith.addf %141, %142 : vector<1x32xf32>
    %144 = math.tanh %143 : vector<1x32xf32>
    %145 = arith.mulf %140, %144 : vector<1x32xf32>
    %146 = vector.extract_strided_slice %7 {offsets = [7, 0], sizes = [1, 128], strides = [1, 1]} : vector<8x128xf32> to vector<1x128xf32>
    %147 = arith.truncf %145 : vector<1x32xf32> to vector<1x32xbf16>
    %cst_23 = arith.constant dense<0.000000e+00> : vector<1x128xf32>
    %148 = tpu.matmul %147, %10, %cst_23 {dimension_numbers = #tpu.dot_dimension_numbers<[1], [0], [0], [1], [0, 0, 1, 1], [], []>} : vector<1x32xbf16>, vector<32x128xbf16>, vector<1x128xf32> -> vector<1x128xf32>
    %149 = arith.addf %146, %148 : vector<1x128xf32>
    %150 = arith.negf %149 : vector<1x128xf32>
    %151 = math.exp %150 : vector<1x128xf32>
    %cst_24 = arith.constant 1.000000e+00 : f32
    %152 = vector.broadcast %cst_24 : f32 to vector<1x128xf32>
    %153 = arith.addf %152, %151 : vector<1x128xf32>
    %154 = arith.divf %152, %153 : vector<1x128xf32>
    %155 = math.tanh %149 : vector<1x128xf32>
    %156 = vector.extract_strided_slice %154 {offsets = [0, 0], sizes = [1, 32], strides = [1, 1]} : vector<1x128xf32> to vector<1x32xf32>
    %157 = vector.extract_strided_slice %154 {offsets = [0, 32], sizes = [1, 32], strides = [1, 1]} : vector<1x128xf32> to vector<1x32xf32>
    %158 = vector.extract_strided_slice %155 {offsets = [0, 64], sizes = [1, 32], strides = [1, 1]} : vector<1x128xf32> to vector<1x32xf32>
    %159 = vector.extract_strided_slice %154 {offsets = [0, 96], sizes = [1, 32], strides = [1, 1]} : vector<1x128xf32> to vector<1x32xf32>
    %160 = arith.mulf %157, %143 : vector<1x32xf32>
    %161 = arith.mulf %156, %158 : vector<1x32xf32>
    %162 = arith.addf %160, %161 : vector<1x32xf32>
    %163 = math.tanh %162 : vector<1x32xf32>
    %164 = arith.mulf %159, %163 : vector<1x32xf32>
    %165 = tpu.concatenate %31, %50, %69, %88, %107, %126, %145, %164 in 0 : vector<1x32xf32>, vector<1x32xf32>, vector<1x32xf32>, vector<1x32xf32>, vector<1x32xf32>, vector<1x32xf32>, vector<1x32xf32>, vector<1x32xf32> -> vector<8x32xf32>
    %c1 = arith.constant 1 : index
    %c0_25 = arith.constant 0 : index
    %166 = vector.load %arg4[%c1, %c0_25] : memref<2x128xf32, #tpu.memory_space<vmem>>, vector<1x128xf32>
    %167 = arith.truncf %165 : vector<8x32xf32> to vector<8x32xbf16>
    %c0_26 = arith.constant 0 : index
    %c0_27 = arith.constant 0 : index
    %c0_28 = arith.constant 0 : index
    %168 = vector.load %arg2[%c0_26, %c0_27, %c0_28] : memref<1x32x128xf32, #tpu.memory_space<vmem>>, vector<1x32x128xf32>
    %169 = vector.shape_cast %168 : vector<1x32x128xf32> to vector<32x128xf32>
    %170 = arith.truncf %169 : vector<32x128xf32> to vector<32x128xbf16>
    %cst_29 = arith.constant dense<0.000000e+00> : vector<8x128xf32>
    %171 = tpu.matmul %167, %170, %cst_29 {dimension_numbers = #tpu.dot_dimension_numbers<[1], [0], [0], [1], [0, 0, 1, 1], [], []>} : vector<8x32xbf16>, vector<32x128xbf16>, vector<8x128xf32> -> vector<8x128xf32>
    %172 = vector.broadcast %166 : vector<1x128xf32> to vector<8x128xf32>
    %173 = arith.addf %171, %172 : vector<8x128xf32>
    %c1_30 = arith.constant 1 : index
    %c0_31 = arith.constant 0 : index
    %c0_32 = arith.constant 0 : index
    %174 = vector.load %arg3[%c1_30, %c0_31, %c0_32] : memref<2x32x128xf32, #tpu.memory_space<vmem>>, vector<1x32x128xf32>
    %175 = vector.shape_cast %174 : vector<1x32x128xf32> to vector<32x128xf32>
    %176 = arith.truncf %175 : vector<32x128xf32> to vector<32x128xbf16>
    %cst_33 = arith.constant 0.000000e+00 : f32
    %177 = vector.broadcast %cst_33 : f32 to vector<1x32xf32>
    %cst_34 = arith.constant 0.000000e+00 : f32
    %178 = vector.broadcast %cst_34 : f32 to vector<1x32xf32>
    %179 = vector.extract_strided_slice %173 {offsets = [0, 0], sizes = [1, 128], strides = [1, 1]} : vector<8x128xf32> to vector<1x128xf32>
    %180 = arith.truncf %177 : vector<1x32xf32> to vector<1x32xbf16>
    %cst_35 = arith.constant dense<0.000000e+00> : vector<1x128xf32>
    %181 = tpu.matmul %180, %176, %cst_35 {dimension_numbers = #tpu.dot_dimension_numbers<[1], [0], [0], [1], [0, 0, 1, 1], [], []>} : vector<1x32xbf16>, vector<32x128xbf16>, vector<1x128xf32> -> vector<1x128xf32>
    %182 = arith.addf %179, %181 : vector<1x128xf32>
    %183 = arith.negf %182 : vector<1x128xf32>
    %184 = math.exp %183 : vector<1x128xf32>
    %cst_36 = arith.constant 1.000000e+00 : f32
    %185 = vector.broadcast %cst_36 : f32 to vector<1x128xf32>
    %186 = arith.addf %185, %184 : vector<1x128xf32>
    %187 = arith.divf %185, %186 : vector<1x128xf32>
    %188 = math.tanh %182 : vector<1x128xf32>
    %189 = vector.extract_strided_slice %187 {offsets = [0, 0], sizes = [1, 32], strides = [1, 1]} : vector<1x128xf32> to vector<1x32xf32>
    %190 = vector.extract_strided_slice %187 {offsets = [0, 32], sizes = [1, 32], strides = [1, 1]} : vector<1x128xf32> to vector<1x32xf32>
    %191 = vector.extract_strided_slice %188 {offsets = [0, 64], sizes = [1, 32], strides = [1, 1]} : vector<1x128xf32> to vector<1x32xf32>
    %192 = vector.extract_strided_slice %187 {offsets = [0, 96], sizes = [1, 32], strides = [1, 1]} : vector<1x128xf32> to vector<1x32xf32>
    %193 = arith.mulf %190, %178 : vector<1x32xf32>
    %194 = arith.mulf %189, %191 : vector<1x32xf32>
    %195 = arith.addf %193, %194 : vector<1x32xf32>
    %196 = math.tanh %195 : vector<1x32xf32>
    %197 = arith.mulf %192, %196 : vector<1x32xf32>
    %198 = vector.extract_strided_slice %173 {offsets = [1, 0], sizes = [1, 128], strides = [1, 1]} : vector<8x128xf32> to vector<1x128xf32>
    %199 = arith.truncf %197 : vector<1x32xf32> to vector<1x32xbf16>
    %cst_37 = arith.constant dense<0.000000e+00> : vector<1x128xf32>
    %200 = tpu.matmul %199, %176, %cst_37 {dimension_numbers = #tpu.dot_dimension_numbers<[1], [0], [0], [1], [0, 0, 1, 1], [], []>} : vector<1x32xbf16>, vector<32x128xbf16>, vector<1x128xf32> -> vector<1x128xf32>
    %201 = arith.addf %198, %200 : vector<1x128xf32>
    %202 = arith.negf %201 : vector<1x128xf32>
    %203 = math.exp %202 : vector<1x128xf32>
    %cst_38 = arith.constant 1.000000e+00 : f32
    %204 = vector.broadcast %cst_38 : f32 to vector<1x128xf32>
    %205 = arith.addf %204, %203 : vector<1x128xf32>
    %206 = arith.divf %204, %205 : vector<1x128xf32>
    %207 = math.tanh %201 : vector<1x128xf32>
    %208 = vector.extract_strided_slice %206 {offsets = [0, 0], sizes = [1, 32], strides = [1, 1]} : vector<1x128xf32> to vector<1x32xf32>
    %209 = vector.extract_strided_slice %206 {offsets = [0, 32], sizes = [1, 32], strides = [1, 1]} : vector<1x128xf32> to vector<1x32xf32>
    %210 = vector.extract_strided_slice %207 {offsets = [0, 64], sizes = [1, 32], strides = [1, 1]} : vector<1x128xf32> to vector<1x32xf32>
    %211 = vector.extract_strided_slice %206 {offsets = [0, 96], sizes = [1, 32], strides = [1, 1]} : vector<1x128xf32> to vector<1x32xf32>
    %212 = arith.mulf %209, %195 : vector<1x32xf32>
    %213 = arith.mulf %208, %210 : vector<1x32xf32>
    %214 = arith.addf %212, %213 : vector<1x32xf32>
    %215 = math.tanh %214 : vector<1x32xf32>
    %216 = arith.mulf %211, %215 : vector<1x32xf32>
    %217 = vector.extract_strided_slice %173 {offsets = [2, 0], sizes = [1, 128], strides = [1, 1]} : vector<8x128xf32> to vector<1x128xf32>
    %218 = arith.truncf %216 : vector<1x32xf32> to vector<1x32xbf16>
    %cst_39 = arith.constant dense<0.000000e+00> : vector<1x128xf32>
    %219 = tpu.matmul %218, %176, %cst_39 {dimension_numbers = #tpu.dot_dimension_numbers<[1], [0], [0], [1], [0, 0, 1, 1], [], []>} : vector<1x32xbf16>, vector<32x128xbf16>, vector<1x128xf32> -> vector<1x128xf32>
    %220 = arith.addf %217, %219 : vector<1x128xf32>
    %221 = arith.negf %220 : vector<1x128xf32>
    %222 = math.exp %221 : vector<1x128xf32>
    %cst_40 = arith.constant 1.000000e+00 : f32
    %223 = vector.broadcast %cst_40 : f32 to vector<1x128xf32>
    %224 = arith.addf %223, %222 : vector<1x128xf32>
    %225 = arith.divf %223, %224 : vector<1x128xf32>
    %226 = math.tanh %220 : vector<1x128xf32>
    %227 = vector.extract_strided_slice %225 {offsets = [0, 0], sizes = [1, 32], strides = [1, 1]} : vector<1x128xf32> to vector<1x32xf32>
    %228 = vector.extract_strided_slice %225 {offsets = [0, 32], sizes = [1, 32], strides = [1, 1]} : vector<1x128xf32> to vector<1x32xf32>
    %229 = vector.extract_strided_slice %226 {offsets = [0, 64], sizes = [1, 32], strides = [1, 1]} : vector<1x128xf32> to vector<1x32xf32>
    %230 = vector.extract_strided_slice %225 {offsets = [0, 96], sizes = [1, 32], strides = [1, 1]} : vector<1x128xf32> to vector<1x32xf32>
    %231 = arith.mulf %228, %214 : vector<1x32xf32>
    %232 = arith.mulf %227, %229 : vector<1x32xf32>
    %233 = arith.addf %231, %232 : vector<1x32xf32>
    %234 = math.tanh %233 : vector<1x32xf32>
    %235 = arith.mulf %230, %234 : vector<1x32xf32>
    %236 = vector.extract_strided_slice %173 {offsets = [3, 0], sizes = [1, 128], strides = [1, 1]} : vector<8x128xf32> to vector<1x128xf32>
    %237 = arith.truncf %235 : vector<1x32xf32> to vector<1x32xbf16>
    %cst_41 = arith.constant dense<0.000000e+00> : vector<1x128xf32>
    %238 = tpu.matmul %237, %176, %cst_41 {dimension_numbers = #tpu.dot_dimension_numbers<[1], [0], [0], [1], [0, 0, 1, 1], [], []>} : vector<1x32xbf16>, vector<32x128xbf16>, vector<1x128xf32> -> vector<1x128xf32>
    %239 = arith.addf %236, %238 : vector<1x128xf32>
    %240 = arith.negf %239 : vector<1x128xf32>
    %241 = math.exp %240 : vector<1x128xf32>
    %cst_42 = arith.constant 1.000000e+00 : f32
    %242 = vector.broadcast %cst_42 : f32 to vector<1x128xf32>
    %243 = arith.addf %242, %241 : vector<1x128xf32>
    %244 = arith.divf %242, %243 : vector<1x128xf32>
    %245 = math.tanh %239 : vector<1x128xf32>
    %246 = vector.extract_strided_slice %244 {offsets = [0, 0], sizes = [1, 32], strides = [1, 1]} : vector<1x128xf32> to vector<1x32xf32>
    %247 = vector.extract_strided_slice %244 {offsets = [0, 32], sizes = [1, 32], strides = [1, 1]} : vector<1x128xf32> to vector<1x32xf32>
    %248 = vector.extract_strided_slice %245 {offsets = [0, 64], sizes = [1, 32], strides = [1, 1]} : vector<1x128xf32> to vector<1x32xf32>
    %249 = vector.extract_strided_slice %244 {offsets = [0, 96], sizes = [1, 32], strides = [1, 1]} : vector<1x128xf32> to vector<1x32xf32>
    %250 = arith.mulf %247, %233 : vector<1x32xf32>
    %251 = arith.mulf %246, %248 : vector<1x32xf32>
    %252 = arith.addf %250, %251 : vector<1x32xf32>
    %253 = math.tanh %252 : vector<1x32xf32>
    %254 = arith.mulf %249, %253 : vector<1x32xf32>
    %255 = vector.extract_strided_slice %173 {offsets = [4, 0], sizes = [1, 128], strides = [1, 1]} : vector<8x128xf32> to vector<1x128xf32>
    %256 = arith.truncf %254 : vector<1x32xf32> to vector<1x32xbf16>
    %cst_43 = arith.constant dense<0.000000e+00> : vector<1x128xf32>
    %257 = tpu.matmul %256, %176, %cst_43 {dimension_numbers = #tpu.dot_dimension_numbers<[1], [0], [0], [1], [0, 0, 1, 1], [], []>} : vector<1x32xbf16>, vector<32x128xbf16>, vector<1x128xf32> -> vector<1x128xf32>
    %258 = arith.addf %255, %257 : vector<1x128xf32>
    %259 = arith.negf %258 : vector<1x128xf32>
    %260 = math.exp %259 : vector<1x128xf32>
    %cst_44 = arith.constant 1.000000e+00 : f32
    %261 = vector.broadcast %cst_44 : f32 to vector<1x128xf32>
    %262 = arith.addf %261, %260 : vector<1x128xf32>
    %263 = arith.divf %261, %262 : vector<1x128xf32>
    %264 = math.tanh %258 : vector<1x128xf32>
    %265 = vector.extract_strided_slice %263 {offsets = [0, 0], sizes = [1, 32], strides = [1, 1]} : vector<1x128xf32> to vector<1x32xf32>
    %266 = vector.extract_strided_slice %263 {offsets = [0, 32], sizes = [1, 32], strides = [1, 1]} : vector<1x128xf32> to vector<1x32xf32>
    %267 = vector.extract_strided_slice %264 {offsets = [0, 64], sizes = [1, 32], strides = [1, 1]} : vector<1x128xf32> to vector<1x32xf32>
    %268 = vector.extract_strided_slice %263 {offsets = [0, 96], sizes = [1, 32], strides = [1, 1]} : vector<1x128xf32> to vector<1x32xf32>
    %269 = arith.mulf %266, %252 : vector<1x32xf32>
    %270 = arith.mulf %265, %267 : vector<1x32xf32>
    %271 = arith.addf %269, %270 : vector<1x32xf32>
    %272 = math.tanh %271 : vector<1x32xf32>
    %273 = arith.mulf %268, %272 : vector<1x32xf32>
    %274 = vector.extract_strided_slice %173 {offsets = [5, 0], sizes = [1, 128], strides = [1, 1]} : vector<8x128xf32> to vector<1x128xf32>
    %275 = arith.truncf %273 : vector<1x32xf32> to vector<1x32xbf16>
    %cst_45 = arith.constant dense<0.000000e+00> : vector<1x128xf32>
    %276 = tpu.matmul %275, %176, %cst_45 {dimension_numbers = #tpu.dot_dimension_numbers<[1], [0], [0], [1], [0, 0, 1, 1], [], []>} : vector<1x32xbf16>, vector<32x128xbf16>, vector<1x128xf32> -> vector<1x128xf32>
    %277 = arith.addf %274, %276 : vector<1x128xf32>
    %278 = arith.negf %277 : vector<1x128xf32>
    %279 = math.exp %278 : vector<1x128xf32>
    %cst_46 = arith.constant 1.000000e+00 : f32
    %280 = vector.broadcast %cst_46 : f32 to vector<1x128xf32>
    %281 = arith.addf %280, %279 : vector<1x128xf32>
    %282 = arith.divf %280, %281 : vector<1x128xf32>
    %283 = math.tanh %277 : vector<1x128xf32>
    %284 = vector.extract_strided_slice %282 {offsets = [0, 0], sizes = [1, 32], strides = [1, 1]} : vector<1x128xf32> to vector<1x32xf32>
    %285 = vector.extract_strided_slice %282 {offsets = [0, 32], sizes = [1, 32], strides = [1, 1]} : vector<1x128xf32> to vector<1x32xf32>
    %286 = vector.extract_strided_slice %283 {offsets = [0, 64], sizes = [1, 32], strides = [1, 1]} : vector<1x128xf32> to vector<1x32xf32>
    %287 = vector.extract_strided_slice %282 {offsets = [0, 96], sizes = [1, 32], strides = [1, 1]} : vector<1x128xf32> to vector<1x32xf32>
    %288 = arith.mulf %285, %271 : vector<1x32xf32>
    %289 = arith.mulf %284, %286 : vector<1x32xf32>
    %290 = arith.addf %288, %289 : vector<1x32xf32>
    %291 = math.tanh %290 : vector<1x32xf32>
    %292 = arith.mulf %287, %291 : vector<1x32xf32>
    %293 = vector.extract_strided_slice %173 {offsets = [6, 0], sizes = [1, 128], strides = [1, 1]} : vector<8x128xf32> to vector<1x128xf32>
    %294 = arith.truncf %292 : vector<1x32xf32> to vector<1x32xbf16>
    %cst_47 = arith.constant dense<0.000000e+00> : vector<1x128xf32>
    %295 = tpu.matmul %294, %176, %cst_47 {dimension_numbers = #tpu.dot_dimension_numbers<[1], [0], [0], [1], [0, 0, 1, 1], [], []>} : vector<1x32xbf16>, vector<32x128xbf16>, vector<1x128xf32> -> vector<1x128xf32>
    %296 = arith.addf %293, %295 : vector<1x128xf32>
    %297 = arith.negf %296 : vector<1x128xf32>
    %298 = math.exp %297 : vector<1x128xf32>
    %cst_48 = arith.constant 1.000000e+00 : f32
    %299 = vector.broadcast %cst_48 : f32 to vector<1x128xf32>
    %300 = arith.addf %299, %298 : vector<1x128xf32>
    %301 = arith.divf %299, %300 : vector<1x128xf32>
    %302 = math.tanh %296 : vector<1x128xf32>
    %303 = vector.extract_strided_slice %301 {offsets = [0, 0], sizes = [1, 32], strides = [1, 1]} : vector<1x128xf32> to vector<1x32xf32>
    %304 = vector.extract_strided_slice %301 {offsets = [0, 32], sizes = [1, 32], strides = [1, 1]} : vector<1x128xf32> to vector<1x32xf32>
    %305 = vector.extract_strided_slice %302 {offsets = [0, 64], sizes = [1, 32], strides = [1, 1]} : vector<1x128xf32> to vector<1x32xf32>
    %306 = vector.extract_strided_slice %301 {offsets = [0, 96], sizes = [1, 32], strides = [1, 1]} : vector<1x128xf32> to vector<1x32xf32>
    %307 = arith.mulf %304, %290 : vector<1x32xf32>
    %308 = arith.mulf %303, %305 : vector<1x32xf32>
    %309 = arith.addf %307, %308 : vector<1x32xf32>
    %310 = math.tanh %309 : vector<1x32xf32>
    %311 = arith.mulf %306, %310 : vector<1x32xf32>
    %312 = vector.extract_strided_slice %173 {offsets = [7, 0], sizes = [1, 128], strides = [1, 1]} : vector<8x128xf32> to vector<1x128xf32>
    %313 = arith.truncf %311 : vector<1x32xf32> to vector<1x32xbf16>
    %cst_49 = arith.constant dense<0.000000e+00> : vector<1x128xf32>
    %314 = tpu.matmul %313, %176, %cst_49 {dimension_numbers = #tpu.dot_dimension_numbers<[1], [0], [0], [1], [0, 0, 1, 1], [], []>} : vector<1x32xbf16>, vector<32x128xbf16>, vector<1x128xf32> -> vector<1x128xf32>
    %315 = arith.addf %312, %314 : vector<1x128xf32>
    %316 = arith.negf %315 : vector<1x128xf32>
    %317 = math.exp %316 : vector<1x128xf32>
    %cst_50 = arith.constant 1.000000e+00 : f32
    %318 = vector.broadcast %cst_50 : f32 to vector<1x128xf32>
    %319 = arith.addf %318, %317 : vector<1x128xf32>
    %320 = arith.divf %318, %319 : vector<1x128xf32>
    %321 = math.tanh %315 : vector<1x128xf32>
    %322 = vector.extract_strided_slice %320 {offsets = [0, 0], sizes = [1, 32], strides = [1, 1]} : vector<1x128xf32> to vector<1x32xf32>
    %323 = vector.extract_strided_slice %320 {offsets = [0, 32], sizes = [1, 32], strides = [1, 1]} : vector<1x128xf32> to vector<1x32xf32>
    %324 = vector.extract_strided_slice %321 {offsets = [0, 64], sizes = [1, 32], strides = [1, 1]} : vector<1x128xf32> to vector<1x32xf32>
    %325 = vector.extract_strided_slice %320 {offsets = [0, 96], sizes = [1, 32], strides = [1, 1]} : vector<1x128xf32> to vector<1x32xf32>
    %326 = arith.mulf %323, %309 : vector<1x32xf32>
    %327 = arith.mulf %322, %324 : vector<1x32xf32>
    %328 = arith.addf %326, %327 : vector<1x32xf32>
    %329 = math.tanh %328 : vector<1x32xf32>
    %330 = arith.mulf %325, %329 : vector<1x32xf32>
    %c0_51 = arith.constant 0 : index
    %c0_52 = arith.constant 0 : index
    %331 = vector.load %arg5[%c0_51, %c0_52] : memref<32x4xf32, #tpu.memory_space<vmem>>, vector<32x4xf32>
    %cst_53 = arith.constant dense<0.000000e+00> : vector<1x4xf32>
    %332 = tpu.matmul %330, %331, %cst_53 {dimension_numbers = #tpu.dot_dimension_numbers<[1], [0], [0], [1], [0, 0, 1, 1], [], []>} : vector<1x32xf32>, vector<32x4xf32>, vector<1x4xf32> -> vector<1x4xf32>
    %c0_54 = arith.constant 0 : index
    %c0_55 = arith.constant 0 : index
    %333 = vector.load %arg6[%c0_54, %c0_55] : memref<1x4xf32, #tpu.memory_space<vmem>>, vector<1x4xf32>
    %334 = arith.addf %332, %333 : vector<1x4xf32>
    %c0_56 = arith.constant 0 : index
    %c0_57 = arith.constant 0 : index
    %335 = vector.load %arg7[%c0_56, %c0_57] : memref<1x4xf32, #tpu.memory_space<vmem>>, vector<1x4xf32>
    tpu.vector_store %arg7[%c0_56, %c0_57], %334 {strides = array<i32>} : memref<1x4xf32, #tpu.memory_space<vmem>>, vector<1x4xf32>,
    return
  }
}

</mosaic_0001>

<llo_original>
// kernel: simple_rnn_forward.1
$region0: #{simple_rnn_forward.1}
  #allocation0 [shape = 'u32[]', space=smem, size = 0x4, offset = 0x4, fixed_abs, tag = 'smem constant byte address 0x4 - core index']
  #allocation1 [shape = 'u32[72,128]{1,0:T(1,128)}', space=vmem, size = 0x9000, scoped, tag = 'internal scratch']
  %s0 = inlined_call_operand.vmem [shape: f32[8,1], index: 0, kind: input, shape index: {}]
  %s1 = inlined_call_operand.vmem [shape: f32[1,128], index: 1, kind: input, shape index: {}]
  %s2 = inlined_call_operand.vmem [shape: f32[1,32,128], index: 2, kind: input, shape index: {}]
  %s3 = inlined_call_operand.hbm [shape: f32[2,32,128], index: 3, kind: input, shape index: {}]
  %s4 = inlined_call_operand.vmem [shape: f32[2,128], index: 4, kind: input, shape index: {}]
  %s5 = inlined_call_operand.vmem [shape: f32[32,4], index: 5, kind: input, shape index: {}]
  %s6 = inlined_call_operand.vmem [shape: f32[1,4], index: 6, kind: input, shape index: {}]
  %s7 = inlined_call_operand.hbm [shape: f32[1,4], index: 7, kind: output, shape index: {}]
  %s8 = sld [smem:[#allocation0]]
  $region42: #{simple_rnn_forward.1} parent=0
    _
  %s10 = ssub.s32 1, %s8
  %s11 = scalar_select 0, %s10, %s8
  $region1: #{simple_rnn_forward.1} parent=0
    #allocation2 [shape = 'u8[32768]{0}', space=vmem, size = 0x8000, scoped, tag = 'input window, operand 3, single buffered']
    #allocation3 [shape = 's32[1]{0}', space=sflag, size = 0x4, scoped, tag = 'scoped memory for simple_rnn_forward.1']
    #allocation4 [shape = 's32[1]{0}', space=sflag, size = 0x4, scoped, tag = 'scoped memory for simple_rnn_forward.1']
    #allocation5 [shape = 'u8[512]{0}', space=vmem, size = 0x400, scoped, tag = 'output window, operand 0, single buffered']
    %12 = vsyncpa [#allocation3], 0
    %13 = vsyncpa [#allocation4], 0
    // Predicated region
    $region2: #{simple_rnn_forward.1} parent=1 // pred_check
      _
    $region3: #{simple_rnn_forward.1} parent=1 // pred_check_branch
      %15 = sbr.rel (0) target = $region5
    $region4: #{simple_rnn_forward.1} parent=1 // pred_region
      _
    $region5: #{simple_rnn_forward.1} parent=1 // pred_fallthru
      _
    // Predicated region
    $region6: #{simple_rnn_forward.1} parent=1 // pred_check
      _
    $region7: #{simple_rnn_forward.1} parent=1 // pred_check_branch
      %17 = sbr.rel (0) target = $region9
    $region8: #{simple_rnn_forward.1} parent=1 // pred_region
      _
    $region9: #{simple_rnn_forward.1} parent=1 // pred_fallthru
      _
    // Predicated region
    $region10: #{simple_rnn_forward.1} parent=1 // pred_check
      _
    $region11: #{simple_rnn_forward.1} parent=1 // pred_check_branch
      %19 = sbr.rel (0) target = $region13
    $region12: #{simple_rnn_forward.1} parent=1 // pred_region
      _
    $region13: #{simple_rnn_forward.1} parent=1 // pred_fallthru
      _
    // Predicated region
    $region14: #{simple_rnn_forward.1} parent=1 // pred_check
      _
    $region15: #{simple_rnn_forward.1} parent=1 // pred_check_branch
      %21 = sbr.rel (0) target = $region17
    $region16: #{simple_rnn_forward.1} parent=1 // pred_region
      %23 = vsyncadd [#allocation3], 0
      %s24 = sshll.u32 %s3, 4
      %s25 = int_to_ptr.hbm [resolvable:$true] %s24
      %s26 = sshll.u32 [#allocation2], 4
      %s27 = int_to_ptr.vmem [resolvable:$true] %s26
      %32 = dma.hbm_to_vmem [thread:$0]  %s25, 1024, %s27, [#allocation3], 128, 128, 8
    $region17: #{simple_rnn_forward.1} parent=1 // pred_fallthru
      _
    // Predicated region
    $region18: #{simple_rnn_forward.1} parent=1 // pred_check
      _
    $region19: #{simple_rnn_forward.1} parent=1 // pred_check_branch
      %34 = sbr.rel (0) target = $region21
    $region20: #{simple_rnn_forward.1} parent=1 // pred_region
      _
    $region21: #{simple_rnn_forward.1} parent=1 // pred_fallthru
      _
    // Predicated region
    $region22: #{simple_rnn_forward.1} parent=1 // pred_check
      _
    $region23: #{simple_rnn_forward.1} parent=1 // pred_check_branch
      %36 = sbr.rel (0) target = $region25
    $region24: #{simple_rnn_forward.1} parent=1 // pred_region
      _
    $region25: #{simple_rnn_forward.1} parent=1 // pred_fallthru
      _
    // Predicated region
    $region26: #{simple_rnn_forward.1} parent=1 // pred_check
      _
    $region27: #{simple_rnn_forward.1} parent=1 // pred_check_branch
      %38 = sbr.rel (0) target = $region29
    $region28: #{simple_rnn_forward.1} parent=1 // pred_region
      _
    $region29: #{simple_rnn_forward.1} parent=1 // pred_fallthru
      _
    // Predicated region
    $region30: #{simple_rnn_forward.1} parent=1 // pred_check
      _
    $region31: #{simple_rnn_forward.1} parent=1 // pred_check_branch
      %40 = sbr.rel (0) target = $region33
    $region32: #{simple_rnn_forward.1} parent=1 // pred_region
      %42 = dma.done [#allocation3], 1024
    $region33: #{simple_rnn_forward.1} parent=1 // pred_fallthru
      _
    %v44 = vld [vmem:[%s4] sm:$0x1]
    %v45 = vld [vmem:[%s0] sm:$0xff]
    %v46 = vld [vmem:[%s1] sm:$0x1]
    %48 = vset.pattern.permute.xlu0 0
    %49 = vperm.xlu0 %48, %v45
    %v50 = vpop.permute.xlu0 %49
    %v53 = vperm.slane %v46, 0
    %v55 = vmul.f32 %v50, %v53
    %v56 = vperm.slane %v44, 0
    %v57 = vadd.f32 %v55, %v56
    %v58 = vld [vmem:[#allocation2] sm:$0xff]
    %v59 = vld [vmem:[#allocation2 + $0x8] sm:$0xff]
    %v60 = vld [vmem:[#allocation2 + $0x10] sm:$0xff]
    %v61 = vld [vmem:[#allocation2 + $0x18] sm:$0xff]
    %v62 = vpack.c.bf16 %v59, %v58
    %v63 = vpack.c.bf16 %v61, %v60
    %vm64 = vcmask 261120
    %v66 = vsel %vm64, 0, 0
    %68 = vmatpush.bf16.msra.mxu0 0
    %69 = vmatpush.bf16.msra.mxu0 0
    %70 = vmatpush.bf16.msra.mxu0 0
    %71 = vmatpush.bf16.msra.mxu0 0
    %72 = vmatpush.bf16.msra.mxu0 0
    %73 = vmatpush.bf16.msra.mxu0 0
    %74 = vmatpush.bf16.msra.mxu0 %v63
    %75 = vmatpush.bf16.msra.mxu0 %v62
    %76 = vmatmul.bf16.gmra.mxu0 %v66
    %v77 = vpop.f32.mrf.mxu0
    %v78 = vadd.f32 0.0, %v77
    %v79 = vpop.f32.mrf.mxu0
    %80 = vdwg.mxu0
    %v81 = vadd.f32 %v57, %v78
    %v82 = vxor.u32 %v81, 2147483648
    %v83 = vmul.f32 %v82, 1.442695
    %v84 = vpow.pop %v83
    %v85 = vadd.f32 %v84, 1.0
    %v86 = vrcp.pop %v85
    %v87 = vmul.f32 %v85, %v86
    %v88 = vsub.f32 1.0, %v87
    %v89 = vmul.f32 %v86, %v88
    %v90 = vadd.f32 %v86, %v89
    %vm91 = vweird.f32 %v85
    %vm92 = vweird.f32 %v86
    %vm93 = vmor %vm91, %vm92
    %v94 = vsel %vm93, %v86, %v90
    %v95 = vand.u32 2147483647, %v85
    %vm96 = vcmp.eq.f32.partialorder %v95, 8.507059e+37
    %v97 = vand.u32 %v85, 2147483648
    %v98 = vor.u32 1.1754944e-38, %v97
    %v99 = vsel %vm96, %v98, %v94
    %v100 = vmul.f32 1.0, %v99
    %v101 = vtanh.pop %v81
    %v102 = vmul.f32 %v100, 0.0
    %104 = vrot.lane.b32.xlu0 %v101, 64
    %v105 = vpop.permute.xlu0 %104
    %v107 = vmul.f32 %v100, %v105
    %109 = vrot.lane.b32.xlu0 %v107, 32
    %v110 = vpop.permute.xlu0 %109
    %v112 = vadd.f32 %v102, %v110
    %v113 = vtanh.pop %v112
    %115 = vrot.lane.b32.xlu0 %v113, 64
    %v116 = vpop.permute.xlu0 %115
    %v118 = vmul.f32 %v100, %v116
    %v119 = vpack.c.bf16 %v118, %v118
    %121 = vrot.lane.b32.xlu0 %v119, 32
    %v122 = vpop.permute.xlu0 %121
    %v124 = vsel %vm64, %v122, 0
    %126 = vmatpush.bf16.msra.mxu0 0
    %127 = vmatpush.bf16.msra.mxu0 0
    %128 = vmatpush.bf16.msra.mxu0 0
    %129 = vmatpush.bf16.msra.mxu0 0
    %130 = vmatpush.bf16.msra.mxu0 0
    %131 = vmatpush.bf16.msra.mxu0 0
    %132 = vmatpush.bf16.msra.mxu0 %v63
    %133 = vmatpush.bf16.msra.mxu0 %v62
    %134 = vmatmul.bf16.gmra.mxu0 %v124
    %v135 = vpop.f32.mrf.mxu0
    %v136 = vadd.f32 0.0, %v135
    %v137 = vpop.f32.mrf.mxu0
    %138 = vdwg.mxu0
    %v140 = vrot.slane %v136, 7
    %v142 = vadd.f32 %v57, %v140
    %v143 = vxor.u32 %v142, 2147483648
    %v144 = vmul.f32 %v143, 1.442695
    %v145 = vpow.pop %v144
    %v146 = vadd.f32 %v145, 1.0
    %v147 = vrcp.pop %v146
    %v148 = vmul.f32 %v146, %v147
    %v149 = vsub.f32 1.0, %v148
    %v150 = vmul.f32 %v147, %v149
    %v151 = vadd.f32 %v147, %v150
    %vm152 = vweird.f32 %v146
    %vm153 = vweird.f32 %v147
    %vm154 = vmor %vm152, %vm153
    %v155 = vsel %vm154, %v147, %v151
    %v156 = vand.u32 2147483647, %v146
    %vm157 = vcmp.eq.f32.partialorder %v156, 8.507059e+37
    %v158 = vand.u32 %v146, 2147483648
    %v159 = vor.u32 1.1754944e-38, %v158
    %v160 = vsel %vm157, %v159, %v155
    %v161 = vmul.f32 1.0, %v160
    %v162 = vtanh.pop %v142
    %v164 = vrot.slane %v112, 7
    %v166 = vmul.f32 %v161, %v164
    %168 = vrot.lane.b32.xlu0 %v162, 64
    %v169 = vpop.permute.xlu0 %168
    %v171 = vmul.f32 %v161, %v169
    %173 = vrot.lane.b32.xlu0 %v171, 32
    %v174 = vpop.permute.xlu0 %173
    %v176 = vadd.f32 %v166, %v174
    %v177 = vtanh.pop %v176
    %179 = vrot.lane.b32.xlu0 %v177, 64
    %v180 = vpop.permute.xlu0 %179
    %v182 = vmul.f32 %v161, %v180
    %v183 = vpack.c.bf16 %v182, %v182
    %v185 = vshrl.u32 %v183, 16
    %187 = vrot.lane.b32.xlu0 %v185, 32
    %v188 = vpop.permute.xlu0 %187
    %v190 = vsel %vm64, %v188, 0
    %192 = vmatpush.bf16.msra.mxu0 0
    %193 = vmatpush.bf16.msra.mxu0 0
    %194 = vmatpush.bf16.msra.mxu0 0
    %195 = vmatpush.bf16.msra.mxu0 0
    %196 = vmatpush.bf16.msra.mxu0 0
    %197 = vmatpush.bf16.msra.mxu0 0
    %198 = vmatpush.bf16.msra.mxu0 %v63
    %199 = vmatpush.bf16.msra.mxu0 %v62
    %200 = vmatmul.bf16.gmra.mxu0 %v190
    %v201 = vpop.f32.mrf.mxu0
    %v202 = vadd.f32 0.0, %v201
    %v203 = vpop.f32.mrf.mxu0
    %204 = vdwg.mxu0
    %v206 = vrot.slane %v202, 6
    %v208 = vadd.f32 %v57, %v206
    %v209 = vxor.u32 %v208, 2147483648
    %v210 = vmul.f32 %v209, 1.442695
    %v211 = vpow.pop %v210
    %v212 = vadd.f32 %v211, 1.0
    %v213 = vrcp.pop %v212
    %v214 = vmul.f32 %v212, %v213
    %v215 = vsub.f32 1.0, %v214
    %v216 = vmul.f32 %v213, %v215
    %v217 = vadd.f32 %v213, %v216
    %vm218 = vweird.f32 %v212
    %vm219 = vweird.f32 %v213
    %vm220 = vmor %vm218, %vm219
    %v221 = vsel %vm220, %v213, %v217
    %v222 = vand.u32 2147483647, %v212
    %vm223 = vcmp.eq.f32.partialorder %v222, 8.507059e+37
    %v224 = vand.u32 %v212, 2147483648
    %v225 = vor.u32 1.1754944e-38, %v224
    %v226 = vsel %vm223, %v225, %v221
    %v227 = vmul.f32 1.0, %v226
    %v228 = vtanh.pop %v208
    %v230 = vrot.slane %v176, 7
    %v232 = vmul.f32 %v227, %v230
    %234 = vrot.lane.b32.xlu0 %v228, 64
    %v235 = vpop.permute.xlu0 %234
    %v237 = vmul.f32 %v227, %v235
    %239 = vrot.lane.b32.xlu0 %v237, 32
    %v240 = vpop.permute.xlu0 %239
    %v242 = vadd.f32 %v232, %v240
    %v243 = vtanh.pop %v242
    %245 = vrot.lane.b32.xlu0 %v243, 64
    %v246 = vpop.permute.xlu0 %245
    %v248 = vmul.f32 %v227, %v246
    %v249 = vpack.c.bf16 %v248, %v248
    %v251 = vrot.slane %v249, 1
    %252 = vrot.lane.b32.xlu0 %v251, 32
    %v253 = vpop.permute.xlu0 %252
    %v255 = vsel %vm64, %v253, 0
    %257 = vmatpush.bf16.msra.mxu0 0
    %258 = vmatpush.bf16.msra.mxu0 0
    %259 = vmatpush.bf16.msra.mxu0 0
    %260 = vmatpush.bf16.msra.mxu0 0
    %261 = vmatpush.bf16.msra.mxu0 0
    %262 = vmatpush.bf16.msra.mxu0 0
    %263 = vmatpush.bf16.msra.mxu0 %v63
    %264 = vmatpush.bf16.msra.mxu0 %v62
    %265 = vmatmul.bf16.gmra.mxu0 %v255
    %v266 = vpop.f32.mrf.mxu0
    %v267 = vadd.f32 0.0, %v266
    %v268 = vpop.f32.mrf.mxu0
    %269 = vdwg.mxu0
    %v271 = vrot.slane %v267, 5
    %v273 = vadd.f32 %v57, %v271
    %v274 = vxor.u32 %v273, 2147483648
    %v275 = vmul.f32 %v274, 1.442695
    %v276 = vpow.pop %v275
    %v277 = vadd.f32 %v276, 1.0
    %v278 = vrcp.pop %v277
    %v279 = vmul.f32 %v277, %v278
    %v280 = vsub.f32 1.0, %v279
    %v281 = vmul.f32 %v278, %v280
    %v282 = vadd.f32 %v278, %v281
    %vm283 = vweird.f32 %v277
    %vm284 = vweird.f32 %v278
    %vm285 = vmor %vm283, %vm284
    %v286 = vsel %vm285, %v278, %v282
    %v287 = vand.u32 2147483647, %v277
    %vm288 = vcmp.eq.f32.partialorder %v287, 8.507059e+37
    %v289 = vand.u32 %v277, 2147483648
    %v290 = vor.u32 1.1754944e-38, %v289
    %v291 = vsel %vm288, %v290, %v286
    %v292 = vmul.f32 1.0, %v291
    %v293 = vtanh.pop %v273
    %v295 = vrot.slane %v242, 7
    %v297 = vmul.f32 %v292, %v295
    %299 = vrot.lane.b32.xlu0 %v293, 64
    %v300 = vpop.permute.xlu0 %299
    %v302 = vmul.f32 %v292, %v300
    %304 = vrot.lane.b32.xlu0 %v302, 32
    %v305 = vpop.permute.xlu0 %304
    %v307 = vadd.f32 %v297, %v305
    %v308 = vtanh.pop %v307
    %310 = vrot.lane.b32.xlu0 %v308, 64
    %v311 = vpop.permute.xlu0 %310
    %v313 = vmul.f32 %v292, %v311
    %v314 = vpack.c.bf16 %v313, %v313
    %v316 = vshrl.u32 %v314, 16
    %v318 = vrot.slane %v316, 1
    %319 = vrot.lane.b32.xlu0 %v318, 32
    %v320 = vpop.permute.xlu0 %319
    %v322 = vsel %vm64, %v320, 0
    %324 = vmatpush.bf16.msra.mxu0 0
    %325 = vmatpush.bf16.msra.mxu0 0
    %326 = vmatpush.bf16.msra.mxu0 0
    %327 = vmatpush.bf16.msra.mxu0 0
    %328 = vmatpush.bf16.msra.mxu0 0
    %329 = vmatpush.bf16.msra.mxu0 0
    %330 = vmatpush.bf16.msra.mxu0 %v63
    %331 = vmatpush.bf16.msra.mxu0 %v62
    %332 = vmatmul.bf16.gmra.mxu0 %v322
    %v333 = vpop.f32.mrf.mxu0
    %v334 = vadd.f32 0.0, %v333
    %v335 = vpop.f32.mrf.mxu0
    %336 = vdwg.mxu0
    %v338 = vrot.slane %v334, 4
    %v340 = vadd.f32 %v57, %v338
    %v341 = vxor.u32 %v340, 2147483648
    %v342 = vmul.f32 %v341, 1.442695
    %v343 = vpow.pop %v342
    %v344 = vadd.f32 %v343, 1.0
    %v345 = vrcp.pop %v344
    %v346 = vmul.f32 %v344, %v345
    %v347 = vsub.f32 1.0, %v346
    %v348 = vmul.f32 %v345, %v347
    %v349 = vadd.f32 %v345, %v348
    %vm350 = vweird.f32 %v344
    %vm351 = vweird.f32 %v345
    %vm352 = vmor %vm350, %vm351
    %v353 = vsel %vm352, %v345, %v349
    %v354 = vand.u32 2147483647, %v344
    %vm355 = vcmp.eq.f32.partialorder %v354, 8.507059e+37
    %v356 = vand.u32 %v344, 2147483648
    %v357 = vor.u32 1.1754944e-38, %v356
    %v358 = vsel %vm355, %v357, %v353
    %v359 = vmul.f32 1.0, %v358
    %v360 = vtanh.pop %v340
    %v362 = vrot.slane %v307, 7
    %v364 = vmul.f32 %v359, %v362
    %366 = vrot.lane.b32.xlu0 %v360, 64
    %v367 = vpop.permute.xlu0 %366
    %v369 = vmul.f32 %v359, %v367
    %371 = vrot.lane.b32.xlu0 %v369, 32
    %v372 = vpop.permute.xlu0 %371
    %v374 = vadd.f32 %v364, %v372
    %v375 = vtanh.pop %v374
    %377 = vrot.lane.b32.xlu0 %v375, 64
    %v378 = vpop.permute.xlu0 %377
    %v380 = vmul.f32 %v359, %v378
    %v381 = vpack.c.bf16 %v380, %v380
    %v383 = vrot.slane %v381, 2
    %384 = vrot.lane.b32.xlu0 %v383, 32
    %v385 = vpop.permute.xlu0 %384
    %v387 = vsel %vm64, %v385, 0
    %389 = vmatpush.bf16.msra.mxu0 0
    %390 = vmatpush.bf16.msra.mxu0 0
    %391 = vmatpush.bf16.msra.mxu0 0
    %392 = vmatpush.bf16.msra.mxu0 0
    %393 = vmatpush.bf16.msra.mxu0 0
    %394 = vmatpush.bf16.msra.mxu0 0
    %395 = vmatpush.bf16.msra.mxu0 %v63
    %396 = vmatpush.bf16.msra.mxu0 %v62
    %397 = vmatmul.bf16.gmra.mxu0 %v387
    %v398 = vpop.f32.mrf.mxu0
    %v399 = vadd.f32 0.0, %v398
    %v400 = vpop.f32.mrf.mxu0
    %401 = vdwg.mxu0
    %v403 = vrot.slane %v399, 3
    %v405 = vadd.f32 %v57, %v403
    %v406 = vxor.u32 %v405, 2147483648
    %v407 = vmul.f32 %v406, 1.442695
    %v408 = vpow.pop %v407
    %v409 = vadd.f32 %v408, 1.0
    %v410 = vrcp.pop %v409
    %v411 = vmul.f32 %v409, %v410
    %v412 = vsub.f32 1.0, %v411
    %v413 = vmul.f32 %v410, %v412
    %v414 = vadd.f32 %v410, %v413
    %vm415 = vweird.f32 %v409
    %vm416 = vweird.f32 %v410
    %vm417 = vmor %vm415, %vm416
    %v418 = vsel %vm417, %v410, %v414
    %v419 = vand.u32 2147483647, %v409
    %vm420 = vcmp.eq.f32.partialorder %v419, 8.507059e+37
    %v421 = vand.u32 %v409, 2147483648
    %v422 = vor.u32 1.1754944e-38, %v421
    %v423 = vsel %vm420, %v422, %v418
    %v424 = vmul.f32 1.0, %v423
    %v425 = vtanh.pop %v405
    %v427 = vrot.slane %v374, 7
    %v429 = vmul.f32 %v424, %v427
    %431 = vrot.lane.b32.xlu0 %v425, 64
    %v432 = vpop.permute.xlu0 %431
    %v434 = vmul.f32 %v424, %v432
    %436 = vrot.lane.b32.xlu0 %v434, 32
    %v437 = vpop.permute.xlu0 %436
    %v439 = vadd.f32 %v429, %v437
    %v440 = vtanh.pop %v439
    %442 = vrot.lane.b32.xlu0 %v440, 64
    %v443 = vpop.permute.xlu0 %442
    %v445 = vmul.f32 %v424, %v443
    %v446 = vpack.c.bf16 %v445, %v445
    %v448 = vshrl.u32 %v446, 16
    %v450 = vrot.slane %v448, 2
    %451 = vrot.lane.b32.xlu0 %v450, 32
    %v452 = vpop.permute.xlu0 %451
    %v454 = vsel %vm64, %v452, 0
    %456 = vmatpush.bf16.msra.mxu0 0
    %457 = vmatpush.bf16.msra.mxu0 0
    %458 = vmatpush.bf16.msra.mxu0 0
    %459 = vmatpush.bf16.msra.mxu0 0
    %460 = vmatpush.bf16.msra.mxu0 0
    %461 = vmatpush.bf16.msra.mxu0 0
    %462 = vmatpush.bf16.msra.mxu0 %v63
    %463 = vmatpush.bf16.msra.mxu0 %v62
    %464 = vmatmul.bf16.gmra.mxu0 %v454
    %v465 = vpop.f32.mrf.mxu0
    %v466 = vadd.f32 0.0, %v465
    %v467 = vpop.f32.mrf.mxu0
    %468 = vdwg.mxu0
    %v470 = vrot.slane %v466, 2
    %v472 = vadd.f32 %v57, %v470
    %v473 = vxor.u32 %v472, 2147483648
    %v474 = vmul.f32 %v473, 1.442695
    %v475 = vpow.pop %v474
    %v476 = vadd.f32 %v475, 1.0
    %v477 = vrcp.pop %v476
    %v478 = vmul.f32 %v476, %v477
    %v479 = vsub.f32 1.0, %v478
    %v480 = vmul.f32 %v477, %v479
    %v481 = vadd.f32 %v477, %v480
    %vm482 = vweird.f32 %v476
    %vm483 = vweird.f32 %v477
    %vm484 = vmor %vm482, %vm483
    %v485 = vsel %vm484, %v477, %v481
    %v486 = vand.u32 2147483647, %v476
    %vm487 = vcmp.eq.f32.partialorder %v486, 8.507059e+37
    %v488 = vand.u32 %v476, 2147483648
    %v489 = vor.u32 1.1754944e-38, %v488
    %v490 = vsel %vm487, %v489, %v485
    %v491 = vmul.f32 1.0, %v490
    %v492 = vtanh.pop %v472
    %v494 = vrot.slane %v439, 7
    %v496 = vmul.f32 %v491, %v494
    %498 = vrot.lane.b32.xlu0 %v492, 64
    %v499 = vpop.permute.xlu0 %498
    %v501 = vmul.f32 %v491, %v499
    %503 = vrot.lane.b32.xlu0 %v501, 32
    %v504 = vpop.permute.xlu0 %503
    %v506 = vadd.f32 %v496, %v504
    %v507 = vtanh.pop %v506
    %509 = vrot.lane.b32.xlu0 %v507, 64
    %v510 = vpop.permute.xlu0 %509
    %v512 = vmul.f32 %v491, %v510
    %v513 = vpack.c.bf16 %v512, %v512
    %v515 = vrot.slane %v513, 3
    %516 = vrot.lane.b32.xlu0 %v515, 32
    %v517 = vpop.permute.xlu0 %516
    %v519 = vsel %vm64, %v517, 0
    %521 = vmatpush.bf16.msra.mxu0 0
    %522 = vmatpush.bf16.msra.mxu0 0
    %523 = vmatpush.bf16.msra.mxu0 0
    %524 = vmatpush.bf16.msra.mxu0 0
    %525 = vmatpush.bf16.msra.mxu0 0
    %526 = vmatpush.bf16.msra.mxu0 0
    %527 = vmatpush.bf16.msra.mxu0 %v63
    %528 = vmatpush.bf16.msra.mxu0 %v62
    %529 = vmatmul.bf16.gmra.mxu0 %v519
    %v530 = vpop.f32.mrf.mxu0
    %v531 = vadd.f32 0.0, %v530
    %v532 = vpop.f32.mrf.mxu0
    %533 = vdwg.mxu0
    %v535 = vrot.slane %v531, 1
    %v537 = vadd.f32 %v57, %v535
    %v538 = vxor.u32 %v537, 2147483648
    %v539 = vmul.f32 %v538, 1.442695
    %v540 = vpow.pop %v539
    %v541 = vadd.f32 %v540, 1.0
    %v542 = vrcp.pop %v541
    %v543 = vmul.f32 %v541, %v542
    %v544 = vsub.f32 1.0, %v543
    %v545 = vmul.f32 %v542, %v544
    %v546 = vadd.f32 %v542, %v545
    %vm547 = vweird.f32 %v541
    %vm548 = vweird.f32 %v542
    %vm549 = vmor %vm547, %vm548
    %v550 = vsel %vm549, %v542, %v546
    %v551 = vand.u32 2147483647, %v541
    %vm552 = vcmp.eq.f32.partialorder %v551, 8.507059e+37
    %v553 = vand.u32 %v541, 2147483648
    %v554 = vor.u32 1.1754944e-38, %v553
    %v555 = vsel %vm552, %v554, %v550
    %v556 = vmul.f32 1.0, %v555
    %v557 = vtanh.pop %v537
    %v559 = vrot.slane %v506, 7
    %v561 = vmul.f32 %v556, %v559
    %563 = vrot.lane.b32.xlu0 %v557, 64
    %v564 = vpop.permute.xlu0 %563
    %v566 = vmul.f32 %v556, %v564
    %568 = vrot.lane.b32.xlu0 %v566, 32
    %v569 = vpop.permute.xlu0 %568
    %v571 = vadd.f32 %v561, %v569
    %v572 = vtanh.pop %v571
    %574 = vrot.lane.b32.xlu0 %v572, 64
    %v575 = vpop.permute.xlu0 %574
    %v577 = vmul.f32 %v556, %v575
    %vm578 = vcmask 1040384
    %v579 = vsel %vm578, %v118, %v182
    %vm580 = vcmask 1041408
    %v581 = vsel %vm580, %v579, %v248
    %vm582 = vcmask 1042432
    %v583 = vsel %vm582, %v581, %v313
    %vm584 = vcmask 1043456
    %v585 = vsel %vm584, %v583, %v380
    %vm586 = vcmask 1044480
    %v587 = vsel %vm586, %v585, %v445
    %vm588 = vcmask 1045504
    %v589 = vsel %vm588, %v587, %v512
    %vm590 = vcmask 1046528
    %v591 = vsel %vm590, %v589, %v577
    %v592 = vld [vmem:[%s4 + $0x1] sm:$0x1]
    %v593 = vpack.c.bf16 %v591, %v591
    %v594 = vld [vmem:[%s2] sm:$0xff]
    %v595 = vld [vmem:[%s2 + $0x8] sm:$0xff]
    %v596 = vld [vmem:[%s2 + $0x10] sm:$0xff]
    %v597 = vld [vmem:[%s2 + $0x18] sm:$0xff]
    %v598 = vpack.c.bf16 %v595, %v594
    %v599 = vpack.c.bf16 %v597, %v596
    %v600 = vperm.slane %v592, 0
    %602 = vrot.lane.b32.xlu0 %v593, 32
    %v603 = vpop.permute.xlu0 %602
    %v605 = vsel %vm64, %v603, 0
    %607 = vmatpush.bf16.msra.mxu0 0
    %608 = vmatpush.bf16.msra.mxu0 0
    %609 = vmatpush.bf16.msra.mxu0 0
    %610 = vmatpush.bf16.msra.mxu0 0
    %611 = vmatpush.bf16.msra.mxu0 0
    %612 = vmatpush.bf16.msra.mxu0 0
    %613 = vmatpush.bf16.msra.mxu0 %v599
    %614 = vmatpush.bf16.msra.mxu0 %v598
    %615 = vmatmul.bf16.gmra.mxu0 %v605
    %v616 = vpop.f32.mrf.mxu0
    %v617 = vadd.f32 %v600, %v616
    %v618 = vpop.f32.mrf.mxu0
    %619 = vdwg.mxu0
    %s620 = scalar_lea.vmem [#allocation2], 32
    %v621 = vld [vmem:[%s620] sm:$0xff]
    %v622 = vld [vmem:[%s620 + $0x8] sm:$0xff]
    %v623 = vld [vmem:[%s620 + $0x10] sm:$0xff]
    %v624 = vld [vmem:[%s620 + $0x18] sm:$0xff]
    %v625 = vpack.c.bf16 %v622, %v621
    %v626 = vpack.c.bf16 %v624, %v623
    %627 = vmatpush.bf16.msra.mxu0 0
    %628 = vmatpush.bf16.msra.mxu0 0
    %629 = vmatpush.bf16.msra.mxu0 0
    %630 = vmatpush.bf16.msra.mxu0 0
    %631 = vmatpush.bf16.msra.mxu0 0
    %632 = vmatpush.bf16.msra.mxu0 0
    %633 = vmatpush.bf16.msra.mxu0 %v626
    %634 = vmatpush.bf16.msra.mxu0 %v625
    %635 = vmatmul.bf16.gmra.mxu0 %v66
    %v636 = vpop.f32.mrf.mxu0
    %v637 = vadd.f32 0.0, %v636
    %v638 = vpop.f32.mrf.mxu0
    %639 = vdwg.mxu0
    %v640 = vadd.f32 %v617, %v637
    %v641 = vxor.u32 %v640, 2147483648
    %v642 = vmul.f32 %v641, 1.442695
    %v643 = vpow.pop %v642
    %v644 = vadd.f32 %v643, 1.0
    %v645 = vrcp.pop %v644
    %v646 = vmul.f32 %v644, %v645
    %v647 = vsub.f32 1.0, %v646
    %v648 = vmul.f32 %v645, %v647
    %v649 = vadd.f32 %v645, %v648
    %vm650 = vweird.f32 %v644
    %vm651 = vweird.f32 %v645
    %vm652 = vmor %vm650, %vm651
    %v653 = vsel %vm652, %v645, %v649
    %v654 = vand.u32 2147483647, %v644
    %vm655 = vcmp.eq.f32.partialorder %v654, 8.507059e+37
    %v656 = vand.u32 %v644, 2147483648
    %v657 = vor.u32 1.1754944e-38, %v656
    %v658 = vsel %vm655, %v657, %v653
    %v659 = vmul.f32 1.0, %v658
    %v660 = vtanh.pop %v640
    %v661 = vmul.f32 %v659, 0.0
    %663 = vrot.lane.b32.xlu0 %v660, 64
    %v664 = vpop.permute.xlu0 %663
    %v666 = vmul.f32 %v659, %v664
    %668 = vrot.lane.b32.xlu0 %v666, 32
    %v669 = vpop.permute.xlu0 %668
    %v671 = vadd.f32 %v661, %v669
    %v672 = vtanh.pop %v671
    %674 = vrot.lane.b32.xlu0 %v672, 64
    %v675 = vpop.permute.xlu0 %674
    %v677 = vmul.f32 %v659, %v675
    %v678 = vpack.c.bf16 %v677, %v677
    %680 = vrot.lane.b32.xlu0 %v678, 32
    %v681 = vpop.permute.xlu0 %680
    %v683 = vsel %vm64, %v681, 0
    %685 = vmatpush.bf16.msra.mxu0 0
    %686 = vmatpush.bf16.msra.mxu0 0
    %687 = vmatpush.bf16.msra.mxu0 0
    %688 = vmatpush.bf16.msra.mxu0 0
    %689 = vmatpush.bf16.msra.mxu0 0
    %690 = vmatpush.bf16.msra.mxu0 0
    %691 = vmatpush.bf16.msra.mxu0 %v626
    %692 = vmatpush.bf16.msra.mxu0 %v625
    %693 = vmatmul.bf16.gmra.mxu0 %v683
    %v694 = vpop.f32.mrf.mxu0
    %v695 = vadd.f32 0.0, %v694
    %v696 = vpop.f32.mrf.mxu0
    %697 = vdwg.mxu0
    %v699 = vrot.slane %v695, 7
    %v701 = vadd.f32 %v617, %v699
    %v702 = vxor.u32 %v701, 2147483648
    %v703 = vmul.f32 %v702, 1.442695
    %v704 = vpow.pop %v703
    %v705 = vadd.f32 %v704, 1.0
    %v706 = vrcp.pop %v705
    %v707 = vmul.f32 %v705, %v706
    %v708 = vsub.f32 1.0, %v707
    %v709 = vmul.f32 %v706, %v708
    %v710 = vadd.f32 %v706, %v709
    %vm711 = vweird.f32 %v705
    %vm712 = vweird.f32 %v706
    %vm713 = vmor %vm711, %vm712
    %v714 = vsel %vm713, %v706, %v710
    %v715 = vand.u32 2147483647, %v705
    %vm716 = vcmp.eq.f32.partialorder %v715, 8.507059e+37
    %v717 = vand.u32 %v705, 2147483648
    %v718 = vor.u32 1.1754944e-38, %v717
    %v719 = vsel %vm716, %v718, %v714
    %v720 = vmul.f32 1.0, %v719
    %v721 = vtanh.pop %v701
    %v723 = vrot.slane %v671, 7
    %v725 = vmul.f32 %v720, %v723
    %727 = vrot.lane.b32.xlu0 %v721, 64
    %v728 = vpop.permute.xlu0 %727
    %v730 = vmul.f32 %v720, %v728
    %732 = vrot.lane.b32.xlu0 %v730, 32
    %v733 = vpop.permute.xlu0 %732
    %v735 = vadd.f32 %v725, %v733
    %v736 = vtanh.pop %v735
    %738 = vrot.lane.b32.xlu0 %v736, 64
    %v739 = vpop.permute.xlu0 %738
    %v741 = vmul.f32 %v720, %v739
    %v742 = vpack.c.bf16 %v741, %v741
    %v744 = vshrl.u32 %v742, 16
    %746 = vrot.lane.b32.xlu0 %v744, 32
    %v747 = vpop.permute.xlu0 %746
    %v749 = vsel %vm64, %v747, 0
    %751 = vmatpush.bf16.msra.mxu0 0
    %752 = vmatpush.bf16.msra.mxu0 0
    %753 = vmatpush.bf16.msra.mxu0 0
    %754 = vmatpush.bf16.msra.mxu0 0
    %755 = vmatpush.bf16.msra.mxu0 0
    %756 = vmatpush.bf16.msra.mxu0 0
    %757 = vmatpush.bf16.msra.mxu0 %v626
    %758 = vmatpush.bf16.msra.mxu0 %v625
    %759 = vmatmul.bf16.gmra.mxu0 %v749
    %v760 = vpop.f32.mrf.mxu0
    %v761 = vadd.f32 0.0, %v760
    %v762 = vpop.f32.mrf.mxu0
    %763 = vdwg.mxu0
    %v765 = vrot.slane %v761, 6
    %v767 = vadd.f32 %v617, %v765
    %v768 = vxor.u32 %v767, 2147483648
    %v769 = vmul.f32 %v768, 1.442695
    %v770 = vpow.pop %v769
    %v771 = vadd.f32 %v770, 1.0
    %v772 = vrcp.pop %v771
    %v773 = vmul.f32 %v771, %v772
    %v774 = vsub.f32 1.0, %v773
    %v775 = vmul.f32 %v772, %v774
    %v776 = vadd.f32 %v772, %v775
    %vm777 = vweird.f32 %v771
    %vm778 = vweird.f32 %v772
    %vm779 = vmor %vm777, %vm778
    %v780 = vsel %vm779, %v772, %v776
    %v781 = vand.u32 2147483647, %v771
    %vm782 = vcmp.eq.f32.partialorder %v781, 8.507059e+37
    %v783 = vand.u32 %v771, 2147483648
    %v784 = vor.u32 1.1754944e-38, %v783
    %v785 = vsel %vm782, %v784, %v780
    %v786 = vmul.f32 1.0, %v785
    %v787 = vtanh.pop %v767
    %v789 = vrot.slane %v735, 7
    %v791 = vmul.f32 %v786, %v789
    %793 = vrot.lane.b32.xlu0 %v787, 64
    %v794 = vpop.permute.xlu0 %793
    %v796 = vmul.f32 %v786, %v794
    %798 = vrot.lane.b32.xlu0 %v796, 32
    %v799 = vpop.permute.xlu0 %798
    %v801 = vadd.f32 %v791, %v799
    %v802 = vtanh.pop %v801
    %804 = vrot.lane.b32.xlu0 %v802, 64
    %v805 = vpop.permute.xlu0 %804
    %v807 = vmul.f32 %v786, %v805
    %v808 = vpack.c.bf16 %v807, %v807
    %v810 = vrot.slane %v808, 1
    %811 = vrot.lane.b32.xlu0 %v810, 32
    %v812 = vpop.permute.xlu0 %811
    %v814 = vsel %vm64, %v812, 0
    %816 = vmatpush.bf16.msra.mxu0 0
    %817 = vmatpush.bf16.msra.mxu0 0
    %818 = vmatpush.bf16.msra.mxu0 0
    %819 = vmatpush.bf16.msra.mxu0 0
    %820 = vmatpush.bf16.msra.mxu0 0
    %821 = vmatpush.bf16.msra.mxu0 0
    %822 = vmatpush.bf16.msra.mxu0 %v626
    %823 = vmatpush.bf16.msra.mxu0 %v625
    %824 = vmatmul.bf16.gmra.mxu0 %v814
    %v825 = vpop.f32.mrf.mxu0
    %v826 = vadd.f32 0.0, %v825
    %v827 = vpop.f32.mrf.mxu0
    %828 = vdwg.mxu0
    %v830 = vrot.slane %v826, 5
    %v832 = vadd.f32 %v617, %v830
    %v833 = vxor.u32 %v832, 2147483648
    %v834 = vmul.f32 %v833, 1.442695
    %v835 = vpow.pop %v834
    %v836 = vadd.f32 %v835, 1.0
    %v837 = vrcp.pop %v836
    %v838 = vmul.f32 %v836, %v837
    %v839 = vsub.f32 1.0, %v838
    %v840 = vmul.f32 %v837, %v839
    %v841 = vadd.f32 %v837, %v840
    %vm842 = vweird.f32 %v836
    %vm843 = vweird.f32 %v837
    %vm844 = vmor %vm842, %vm843
    %v845 = vsel %vm844, %v837, %v841
    %v846 = vand.u32 2147483647, %v836
    %vm847 = vcmp.eq.f32.partialorder %v846, 8.507059e+37
    %v848 = vand.u32 %v836, 2147483648
    %v849 = vor.u32 1.1754944e-38, %v848
    %v850 = vsel %vm847, %v849, %v845
    %v851 = vmul.f32 1.0, %v850
    %v852 = vtanh.pop %v832
    %v854 = vrot.slane %v801, 7
    %v856 = vmul.f32 %v851, %v854
    %858 = vrot.lane.b32.xlu0 %v852, 64
    %v859 = vpop.permute.xlu0 %858
    %v861 = vmul.f32 %v851, %v859
    %863 = vrot.lane.b32.xlu0 %v861, 32
    %v864 = vpop.permute.xlu0 %863
    %v866 = vadd.f32 %v856, %v864
    %v867 = vtanh.pop %v866
    %869 = vrot.lane.b32.xlu0 %v867, 64
    %v870 = vpop.permute.xlu0 %869
    %v872 = vmul.f32 %v851, %v870
    %v873 = vpack.c.bf16 %v872, %v872
    %v875 = vshrl.u32 %v873, 16
    %v877 = vrot.slane %v875, 1
    %878 = vrot.lane.b32.xlu0 %v877, 32
    %v879 = vpop.permute.xlu0 %878
    %v881 = vsel %vm64, %v879, 0
    %883 = vmatpush.bf16.msra.mxu0 0
    %884 = vmatpush.bf16.msra.mxu0 0
    %885 = vmatpush.bf16.msra.mxu0 0
    %886 = vmatpush.bf16.msra.mxu0 0
    %887 = vmatpush.bf16.msra.mxu0 0
    %888 = vmatpush.bf16.msra.mxu0 0
    %889 = vmatpush.bf16.msra.mxu0 %v626
    %890 = vmatpush.bf16.msra.mxu0 %v625
    %891 = vmatmul.bf16.gmra.mxu0 %v881
    %v892 = vpop.f32.mrf.mxu0
    %v893 = vadd.f32 0.0, %v892
    %v894 = vpop.f32.mrf.mxu0
    %895 = vdwg.mxu0
    %v897 = vrot.slane %v893, 4
    %v899 = vadd.f32 %v617, %v897
    %v900 = vxor.u32 %v899, 2147483648
    %v901 = vmul.f32 %v900, 1.442695
    %v902 = vpow.pop %v901
    %v903 = vadd.f32 %v902, 1.0
    %v904 = vrcp.pop %v903
    %v905 = vmul.f32 %v903, %v904
    %v906 = vsub.f32 1.0, %v905
    %v907 = vmul.f32 %v904, %v906
    %v908 = vadd.f32 %v904, %v907
    %vm909 = vweird.f32 %v903
    %vm910 = vweird.f32 %v904
    %vm911 = vmor %vm909, %vm910
    %v912 = vsel %vm911, %v904, %v908
    %v913 = vand.u32 2147483647, %v903
    %vm914 = vcmp.eq.f32.partialorder %v913, 8.507059e+37
    %v915 = vand.u32 %v903, 2147483648
    %v916 = vor.u32 1.1754944e-38, %v915
    %v917 = vsel %vm914, %v916, %v912
    %v918 = vmul.f32 1.0, %v917
    %v919 = vtanh.pop %v899
    %v921 = vrot.slane %v866, 7
    %v923 = vmul.f32 %v918, %v921
    %925 = vrot.lane.b32.xlu0 %v919, 64
    %v926 = vpop.permute.xlu0 %925
    %v928 = vmul.f32 %v918, %v926
    %930 = vrot.lane.b32.xlu0 %v928, 32
    %v931 = vpop.permute.xlu0 %930
    %v933 = vadd.f32 %v923, %v931
    %v934 = vtanh.pop %v933
    %936 = vrot.lane.b32.xlu0 %v934, 64
    %v937 = vpop.permute.xlu0 %936
    %v939 = vmul.f32 %v918, %v937
    %v940 = vpack.c.bf16 %v939, %v939
    %v942 = vrot.slane %v940, 2
    %943 = vrot.lane.b32.xlu0 %v942, 32
    %v944 = vpop.permute.xlu0 %943
    %v946 = vsel %vm64, %v944, 0
    %948 = vmatpush.bf16.msra.mxu0 0
    %949 = vmatpush.bf16.msra.mxu0 0
    %950 = vmatpush.bf16.msra.mxu0 0
    %951 = vmatpush.bf16.msra.mxu0 0
    %952 = vmatpush.bf16.msra.mxu0 0
    %953 = vmatpush.bf16.msra.mxu0 0
    %954 = vmatpush.bf16.msra.mxu0 %v626
    %955 = vmatpush.bf16.msra.mxu0 %v625
    %956 = vmatmul.bf16.gmra.mxu0 %v946
    %v957 = vpop.f32.mrf.mxu0
    %v958 = vadd.f32 0.0, %v957
    %v959 = vpop.f32.mrf.mxu0
    %960 = vdwg.mxu0
    %v962 = vrot.slane %v958, 3
    %v964 = vadd.f32 %v617, %v962
    %v965 = vxor.u32 %v964, 2147483648
    %v966 = vmul.f32 %v965, 1.442695
    %v967 = vpow.pop %v966
    %v968 = vadd.f32 %v967, 1.0
    %v969 = vrcp.pop %v968
    %v970 = vmul.f32 %v968, %v969
    %v971 = vsub.f32 1.0, %v970
    %v972 = vmul.f32 %v969, %v971
    %v973 = vadd.f32 %v969, %v972
    %vm974 = vweird.f32 %v968
    %vm975 = vweird.f32 %v969
    %vm976 = vmor %vm974, %vm975
    %v977 = vsel %vm976, %v969, %v973
    %v978 = vand.u32 2147483647, %v968
    %vm979 = vcmp.eq.f32.partialorder %v978, 8.507059e+37
    %v980 = vand.u32 %v968, 2147483648
    %v981 = vor.u32 1.1754944e-38, %v980
    %v982 = vsel %vm979, %v981, %v977
    %v983 = vmul.f32 1.0, %v982
    %v984 = vtanh.pop %v964
    %v986 = vrot.slane %v933, 7
    %v988 = vmul.f32 %v983, %v986
    %990 = vrot.lane.b32.xlu0 %v984, 64
    %v991 = vpop.permute.xlu0 %990
    %v993 = vmul.f32 %v983, %v991
    %995 = vrot.lane.b32.xlu0 %v993, 32
    %v996 = vpop.permute.xlu0 %995
    %v998 = vadd.f32 %v988, %v996
    %v999 = vtanh.pop %v998
    %1001 = vrot.lane.b32.xlu0 %v999, 64
    %v1002 = vpop.permute.xlu0 %1001
    %v1004 = vmul.f32 %v983, %v1002
    %v1005 = vpack.c.bf16 %v1004, %v1004
    %v1007 = vshrl.u32 %v1005, 16
    %v1009 = vrot.slane %v1007, 2
    %1010 = vrot.lane.b32.xlu0 %v1009, 32
    %v1011 = vpop.permute.xlu0 %1010
    %v1013 = vsel %vm64, %v1011, 0
    %1015 = vmatpush.bf16.msra.mxu0 0
    %1016 = vmatpush.bf16.msra.mxu0 0
    %1017 = vmatpush.bf16.msra.mxu0 0
    %1018 = vmatpush.bf16.msra.mxu0 0
    %1019 = vmatpush.bf16.msra.mxu0 0
    %1020 = vmatpush.bf16.msra.mxu0 0
    %1021 = vmatpush.bf16.msra.mxu0 %v626
    %1022 = vmatpush.bf16.msra.mxu0 %v625
    %1023 = vmatmul.bf16.gmra.mxu0 %v1013
    %v1024 = vpop.f32.mrf.mxu0
    %v1025 = vadd.f32 0.0, %v1024
    %v1026 = vpop.f32.mrf.mxu0
    %1027 = vdwg.mxu0
    %v1029 = vrot.slane %v1025, 2
    %v1031 = vadd.f32 %v617, %v1029
    %v1032 = vxor.u32 %v1031, 2147483648
    %v1033 = vmul.f32 %v1032, 1.442695
    %v1034 = vpow.pop %v1033
    %v1035 = vadd.f32 %v1034, 1.0
    %v1036 = vrcp.pop %v1035
    %v1037 = vmul.f32 %v1035, %v1036
    %v1038 = vsub.f32 1.0, %v1037
    %v1039 = vmul.f32 %v1036, %v1038
    %v1040 = vadd.f32 %v1036, %v1039
    %vm1041 = vweird.f32 %v1035
    %vm1042 = vweird.f32 %v1036
    %vm1043 = vmor %vm1041, %vm1042
    %v1044 = vsel %vm1043, %v1036, %v1040
    %v1045 = vand.u32 2147483647, %v1035
    %vm1046 = vcmp.eq.f32.partialorder %v1045, 8.507059e+37
    %v1047 = vand.u32 %v1035, 2147483648
    %v1048 = vor.u32 1.1754944e-38, %v1047
    %v1049 = vsel %vm1046, %v1048, %v1044
    %v1050 = vmul.f32 1.0, %v1049
    %v1051 = vtanh.pop %v1031
    %v1053 = vrot.slane %v998, 7
    %v1055 = vmul.f32 %v1050, %v1053
    %1057 = vrot.lane.b32.xlu0 %v1051, 64
    %v1058 = vpop.permute.xlu0 %1057
    %v1060 = vmul.f32 %v1050, %v1058
    %1062 = vrot.lane.b32.xlu0 %v1060, 32
    %v1063 = vpop.permute.xlu0 %1062
    %v1065 = vadd.f32 %v1055, %v1063
    %v1066 = vtanh.pop %v1065
    %1068 = vrot.lane.b32.xlu0 %v1066, 64
    %v1069 = vpop.permute.xlu0 %1068
    %v1071 = vmul.f32 %v1050, %v1069
    %v1072 = vpack.c.bf16 %v1071, %v1071
    %v1074 = vrot.slane %v1072, 3
    %1075 = vrot.lane.b32.xlu0 %v1074, 32
    %v1076 = vpop.permute.xlu0 %1075
    %v1078 = vsel %vm64, %v1076, 0
    %1080 = vmatpush.bf16.msra.mxu0 0
    %1081 = vmatpush.bf16.msra.mxu0 0
    %1082 = vmatpush.bf16.msra.mxu0 0
    %1083 = vmatpush.bf16.msra.mxu0 0
    %1084 = vmatpush.bf16.msra.mxu0 0
    %1085 = vmatpush.bf16.msra.mxu0 0
    %1086 = vmatpush.bf16.msra.mxu0 %v626
    %1087 = vmatpush.bf16.msra.mxu0 %v625
    %1088 = vmatmul.bf16.gmra.mxu0 %v1078
    %v1089 = vpop.f32.mrf.mxu0
    %v1090 = vadd.f32 0.0, %v1089
    %v1091 = vpop.f32.mrf.mxu0
    %1092 = vdwg.mxu0
    %v1094 = vrot.slane %v1090, 1
    %v1096 = vadd.f32 %v617, %v1094
    %v1097 = vxor.u32 %v1096, 2147483648
    %v1098 = vmul.f32 %v1097, 1.442695
    %v1099 = vpow.pop %v1098
    %v1100 = vadd.f32 %v1099, 1.0
    %v1101 = vrcp.pop %v1100
    %v1102 = vmul.f32 %v1100, %v1101
    %v1103 = vsub.f32 1.0, %v1102
    %v1104 = vmul.f32 %v1101, %v1103
    %v1105 = vadd.f32 %v1101, %v1104
    %vm1106 = vweird.f32 %v1100
    %vm1107 = vweird.f32 %v1101
    %vm1108 = vmor %vm1106, %vm1107
    %v1109 = vsel %vm1108, %v1101, %v1105
    %v1110 = vand.u32 2147483647, %v1100
    %vm1111 = vcmp.eq.f32.partialorder %v1110, 8.507059e+37
    %v1112 = vand.u32 %v1100, 2147483648
    %v1113 = vor.u32 1.1754944e-38, %v1112
    %v1114 = vsel %vm1111, %v1113, %v1109
    %v1115 = vmul.f32 1.0, %v1114
    %v1116 = vtanh.pop %v1096
    %v1118 = vrot.slane %v1065, 7
    %v1120 = vmul.f32 %v1115, %v1118
    %1122 = vrot.lane.b32.xlu0 %v1116, 64
    %v1123 = vpop.permute.xlu0 %1122
    %v1125 = vmul.f32 %v1115, %v1123
    %1127 = vrot.lane.b32.xlu0 %v1125, 32
    %v1128 = vpop.permute.xlu0 %1127
    %v1130 = vadd.f32 %v1120, %v1128
    %v1131 = vtanh.pop %v1130
    %1133 = vrot.lane.b32.xlu0 %v1131, 64
    %v1134 = vpop.permute.xlu0 %1133
    %v1136 = vmul.f32 %v1115, %v1134
    %v1137 = vld [vmem:[%s5] sm:$0xff]
    %v1138 = vld [vmem:[%s5 + $0x8] sm:$0xff]
    %v1139 = vld [vmem:[%s5 + $0x10] sm:$0xff]
    %v1140 = vld [vmem:[%s5 + $0x18] sm:$0xff]
    %v1141 = vld [vmem:[%s6] sm:$0x1]
    %v1143 = vrot.slane %v1136, 7
    %1144 = vrot.lane.b32.xlu0 %v1143, 32
    %v1145 = vpop.permute.xlu0 %1144
    %v1146 = vsel %vm64, %v1145, 0
    %1148 = vmatpush.msra.mxu0 0.0
    %1149 = vmatpush.msra.mxu0 0.0
    %1150 = vmatpush.msra.mxu0 0.0
    %1151 = vmatpush.msra.mxu0 0.0
    %1152 = vmatpush.msra.mxu0 0.0
    %1153 = vmatpush.msra.mxu0 0.0
    %1154 = vmatpush.msra.mxu0 0.0
    %1155 = vmatpush.msra.mxu0 0.0
    %1156 = vmatpush.msra.mxu0 0.0
    %1157 = vmatpush.msra.mxu0 0.0
    %1158 = vmatpush.msra.mxu0 0.0
    %1159 = vmatpush.msra.mxu0 0.0
    %1160 = vmatpush.msra.mxu0 %v1140
    %1161 = vmatpush.msra.mxu0 %v1139
    %1162 = vmatpush.msra.mxu0 %v1138
    %1163 = vmatpush.msra.mxu0 %v1137
    %1164 = vmatmul.f32.gmra.mxu0 %v1146
    %v1165 = vpop.f32.mrf.mxu0
    %v1166 = vadd.f32 %v1141, %v1165
    %1167 = vdwg.mxu0
    %vm1168 = vcmask 24576
    %1169 = vst.msk [vmem:[#allocation5] sm:$0x1] %vm1168, %v1166
    // Predicated region
    $region34: #{simple_rnn_forward.1} parent=1 // pred_check
      _
    $region35: #{simple_rnn_forward.1} parent=1 // pred_check_branch
      %1171 = sbr.rel (0) target = $region37
    $region36: #{simple_rnn_forward.1} parent=1 // pred_region
      %1173 = vsyncadd [#allocation4], 0
      %s1175 = sshll.u32 [#allocation5], 4
      %s1176 = int_to_ptr.vmem [resolvable:$true] %s1175
      %s1177 = sshll.u32 %s7, 4
      %s1178 = int_to_ptr.hbm [resolvable:$true] %s1177
      %1180 = dma.vmem_to_hbm [thread:$0]  %s1176, 16, %s1178, [#allocation4]
    $region37: #{simple_rnn_forward.1} parent=1 // pred_fallthru
      _
    // Predicated region
    $region38: #{simple_rnn_forward.1} parent=1 // pred_check
      _
    $region39: #{simple_rnn_forward.1} parent=1 // pred_check_branch
      %1182 = sbr.rel (0) target = $region41
    $region40: #{simple_rnn_forward.1} parent=1 // pred_region
      %1184 = dma.done [#allocation4], 16
    $region41: #{simple_rnn_forward.1} parent=1 // pred_fallthru
      _
    %1185 = vsyncpa [#allocation3], 1
    %1186 = vsyncpa [#allocation4], 1

</llo_original>
